<compile_context>
chip_gen: v5e
topology: v5e:2x2
jax: 0.10.0
libtpu: 0.0.40
codegen_flags: <defaults>
</compile_context>

<pallas_src>
import functools

import jax
import jax.numpy as jnp
from jax.experimental import pallas as pl
from jax.experimental.pallas import tpu as pltpu


# ----------------------------------------------------------------------------
# Parameter glue (plain JAX): weight norm, BN folding, weight layout
# ----------------------------------------------------------------------------
def weight_norm_eff(v, g):
    """PyTorch weight_norm (dim=0): W[o] = g[o] * v[o] / ||v[o]||_2."""
    norm = jnp.sqrt(jnp.sum(v * v, axis=tuple(range(1, v.ndim)), keepdims=True))
    return v * (g.reshape((-1,) + (1,) * (v.ndim - 1)) / norm)


def bn_fold(gamma, beta, mean, var, eps=1e-5):
    scale = gamma / jnp.sqrt(var + eps)
    shift = beta - mean * scale
    return scale, shift


def conv_w_to_mat(w_oihw):
    """(Cout, Cin, kh, kw) -> (kh*kw*Cin, Cout); K order = (kh, kw, cin)."""
    cout, cin, kh, kw = w_oihw.shape
    return jnp.transpose(w_oihw, (2, 3, 1, 0)).reshape(kh * kw * cin, cout)


# ----------------------------------------------------------------------------
# Fused kernel: bn1+relu -> conv1(3x3,s) -> bn2+relu -> conv2(3x3) + shortcut
# ----------------------------------------------------------------------------
def _make_block_kernel(H, W, Cin, Np, Ho, Wo, stride, has_sc, cdtype):
    def kernel(x_ref, s1_ref, b1_ref, w1_ref, b2_ref, w2_ref, *rest):
        if has_sc:
            wsc_ref, out_ref, pad1_ref, col1_ref, pad2_ref, col2_ref = rest
        else:
            out_ref, pad1_ref, col1_ref, pad2_ref, col2_ref = rest

        f32 = jnp.float32

        # ---- bn1 + relu prologue (f32).  Zero ONLY the 1-px halo border; the
        #      interior is fully overwritten each step (no full-tile memset,
        #      megacore-safe since nothing persists across steps).
        pad1_ref[0:1, :, :] = jnp.zeros((1, W + 2, Cin), f32)
        pad1_ref[H + 1:H + 2, :, :] = jnp.zeros((1, W + 2, Cin), f32)
        pad1_ref[:, 0:1, :] = jnp.zeros((H + 2, 1, Cin), f32)
        pad1_ref[:, W + 1:W + 2, :] = jnp.zeros((H + 2, 1, Cin), f32)
        pre1 = jnp.maximum(x_ref[...] * s1_ref[...] + b1_ref[...], 0.0)
        pad1_ref[1:H + 1, 1:W + 1, :] = pre1

        # ---- conv1 im2col: 9 shifted (strided) tap reads -> (Ho*Wo, 9*Cin).
        center = None
        for kh in range(3):
            for kw in range(3):
                if stride == 1:
                    patch = pad1_ref[kh:kh + Ho, kw:kw + Wo, :]
                else:
                    patch = pad1_ref[pl.ds(kh, Ho, stride=stride),
                                     pl.ds(kw, Wo, stride=stride), :]
                patch = patch.reshape(Ho * Wo, Cin)
                if kh == 1 and kw == 1:
                    center = patch           # == pre1[::stride, ::stride, :]
                t = kh * 3 + kw
                col1_ref[:, t * Cin:(t + 1) * Cin] = patch

        # ---- conv1: ONE MXU matmul, K = 9*Cin, fp32 accumulation.
        #      (bn2 scale is already folded into the w1 columns.)
        acc1 = jnp.dot(col1_ref[...].astype(cdtype), w1_ref[...],
                       preferred_element_type=jnp.float32)

        # ---- shortcut(pre1): weight-normed 1x1/stride conv, or identity.
        if has_sc:
            sc = jnp.dot(center.astype(cdtype), wsc_ref[...],
                         preferred_element_type=jnp.float32)
        else:
            sc = pre1.reshape(Ho * Wo, Np)   # stride==1, Cin==planes; exact f32

        # ---- dropout2d (eval: identity); bn2 shift + relu epilogue (f32).
        pre2 = jnp.maximum(acc1 + b2_ref[...], 0.0)

        # ---- conv2 halo (border-only zeroing) + im2col + ONE matmul
        #      (K = 9*planes) with the residual add fused into the epilogue.
        pad2_ref[0:1, :, :] = jnp.zeros((1, Wo + 2, Np), f32)
        pad2_ref[Ho + 1:Ho + 2, :, :] = jnp.zeros((1, Wo + 2, Np), f32)
        pad2_ref[:, 0:1, :] = jnp.zeros((Ho + 2, 1, Np), f32)
        pad2_ref[:, Wo + 1:Wo + 2, :] = jnp.zeros((Ho + 2, 1, Np), f32)
        pad2_ref[1:Ho + 1, 1:Wo + 1, :] = pre2.reshape(Ho, Wo, Np)

        for kh in range(3):
            for kw in range(3):
                t = kh * 3 + kw
                col2_ref[:, t * Np:(t + 1) * Np] = (
                    pad2_ref[kh:kh + Ho, kw:kw + Wo, :].reshape(Ho * Wo, Np))

        out = sc + jnp.dot(col2_ref[...].astype(cdtype), w2_ref[...],
                           preferred_element_type=jnp.float32)
        out_ref[...] = out.reshape(Ho, Wo, Np).astype(out_ref.dtype)

    return kernel


# ----------------------------------------------------------------------------
# Module forward (NCHW in / NCHW out, NHWC lane-dense inside)
# ----------------------------------------------------------------------------
def preact_block_wndrop_forward(x_nchw, params, stride,
                                compute_dtype=jnp.bfloat16):
    x = jnp.transpose(x_nchw, (0, 2, 3, 1))        # NCHW -> NHWC
    N, H, W, Cin = x.shape
    planes = params["conv1_g"].shape[0]
    Ho = (H - 1) // stride + 1
    Wo = (W - 1) // stride + 1
    has_sc = (stride != 1) or (Cin != planes)

    scale1, shift1 = bn_fold(*params["bn1"])
    scale2, shift2 = bn_fold(*params["bn2"])

    # conv weights as (9*C, Cout) im2col matrices; bn2 scale folded into w1.
    w1 = conv_w_to_mat(weight_norm_eff(params["conv1_v"], params["conv1_g"]))
    w1 = (w1 * scale2[None, :]).astype(compute_dtype)        # (9*Cin, planes)
    w2 = conv_w_to_mat(weight_norm_eff(params["conv2_v"], params["conv2_g"]))
    w2 = w2.astype(compute_dtype)                            # (9*planes, planes)

    in_specs = [
        pl.BlockSpec((None, H, W, Cin), lambda b: (b, 0, 0, 0)),
        pl.BlockSpec((1, 1, Cin), lambda b: (0, 0, 0)),
        pl.BlockSpec((1, 1, Cin), lambda b: (0, 0, 0)),
        pl.BlockSpec((9 * Cin, planes), lambda b: (0, 0)),
        pl.BlockSpec((1, planes), lambda b: (0, 0)),
        pl.BlockSpec((9 * planes, planes), lambda b: (0, 0)),
    ]
    args = [x, scale1.reshape(1, 1, Cin), shift1.reshape(1, 1, Cin), w1,
            shift2.reshape(1, planes), w2]
    if has_sc:
        wsc = conv_w_to_mat(
            weight_norm_eff(params["sc_v"], params["sc_g"]))  # (Cin, planes)
        in_specs.append(pl.BlockSpec((Cin, planes), lambda b: (0, 0)))
        args.append(wsc.astype(compute_dtype))

    out_nhwc = pl.pallas_call(
        _make_block_kernel(H, W, Cin, planes, Ho, Wo, stride, has_sc,
                           compute_dtype),
        out_shape=jax.ShapeDtypeStruct((N, Ho, Wo, planes), jnp.float32),
        grid=(N,),
        in_specs=in_specs,
        out_specs=pl.BlockSpec((None, Ho, Wo, planes), lambda b: (b, 0, 0, 0)),
        scratch_shapes=[
            pltpu.VMEM((H + 2, W + 2, Cin), jnp.float32),       # pre1 halo
            pltpu.VMEM((Ho * Wo, 9 * Cin), jnp.float32),        # conv1 im2col
            pltpu.VMEM((Ho + 2, Wo + 2, planes), jnp.float32),  # pre2 halo
            pltpu.VMEM((Ho * Wo, 9 * planes), jnp.float32),     # conv2 im2col
        ],
        compiler_params=pltpu.CompilerParams(
            dimension_semantics=("parallel",),
            vmem_limit_bytes=32 * 1024 * 1024),
    )(*args)

    # TODO(synk): for real ResNet shapes, additionally tile output rows (deeper
    # grid so each v7x TensorCore pipelines), hold the halos/im2col in bf16,
    # and emit a lane-dense (N, Ho, Wo*planes) output slab instead of the
    # narrow NHWC store + NCHW transpose below.
    return jnp.transpose(out_nhwc, (0, 3, 1, 2))   # NHWC -> NCHW


# ----------------------------------------------------------------------------
# Pure-JAX reference (lax.conv, fp32 highest precision) for the self-check
# ----------------------------------------------------------------------------
def _conv_nhwc_ref(x, w_oihw, stride, padding):
    return jax.lax.conv_general_dilated(
        x, jnp.transpose(w_oihw, (2, 3, 1, 0)),           # OIHW -> HWIO
        window_strides=(stride, stride), padding=padding,
        dimension_numbers=("NHWC", "HWIO", "NHWC"),
        precision=jax.lax.Precision.HIGHEST)


def _ref_forward(x_nchw, params, stride):
    x = jnp.transpose(x_nchw, (0, 2, 3, 1))
    Cin = x.shape[-1]
    planes = params["conv1_g"].shape[0]
    s1, b1 = bn_fold(*params["bn1"])
    pre1 = jnp.maximum(x * s1 + b1, 0.0)
    w1 = weight_norm_eff(params["conv1_v"], params["conv1_g"])
    h1 = _conv_nhwc_ref(pre1, w1, stride, ((1, 1), (1, 1)))
    if stride != 1 or Cin != planes:
        wsc = weight_norm_eff(params["sc_v"], params["sc_g"])
        shortcut = _conv_nhwc_ref(pre1, wsc, stride, ((0, 0), (0, 0)))
    else:
        shortcut = pre1
    s2, b2 = bn_fold(*params["bn2"])
    pre2 = jnp.maximum(h1 * s2 + b2, 0.0)
    w2 = weight_norm_eff(params["conv2_v"], params["conv2_g"])
    out = _conv_nhwc_ref(pre2, w2, 1, ((1, 1), (1, 1))) + shortcut
    return jnp.transpose(out, (0, 3, 1, 2))


# ----------------------------------------------------------------------------
# Deterministic parameter init + run
# ----------------------------------------------------------------------------
def init_params(key, in_planes, planes):
    ks = jax.random.split(key, 8)
    f32 = jnp.float32
    return {
        # bn: (gamma, beta, running_mean, running_var)
        "bn1": (
            1.0 + 0.1 * jax.random.normal(ks[0], (in_planes,), f32),
            0.1 * jax.random.normal(ks[1], (in_planes,), f32),
            0.1 * jax.random.normal(ks[2], (in_planes,), f32),
            1.0 + 0.1 * jax.random.uniform(ks[3], (in_planes,), f32),
        ),
        "conv1_v": 0.2 * jax.random.normal(ks[4], (planes, in_planes, 3, 3), f32),
        "conv1_g": jnp.linspace(0.5, 1.5, planes, dtype=f32),
        "bn2": (
            jnp.ones((planes,), f32),
            jnp.zeros((planes,), f32),
            jnp.zeros((planes,), f32),
            jnp.ones((planes,), f32),
        ),
        "conv2_v": 0.2 * jax.random.normal(ks[5], (planes, planes, 3, 3), f32),
        "conv2_g": jnp.linspace(0.8, 1.2, planes, dtype=f32),
        "sc_v": 0.2 * jax.random.normal(ks[6], (planes, in_planes, 1, 1), f32),
        "sc_g": jnp.linspace(0.9, 1.1, planes, dtype=f32),
    }


if __name__ == "__main__":
    key = jax.random.PRNGKey(0)
    k_x, k_p, k_x2, k_p2 = jax.random.split(key, 4)

    # Case 1: stride-2 block with channel expansion -> weight-normed 1x1
    # shortcut conv is exercised.
    batch, in_planes, planes, spatial, stride = 2, 4, 8, 16, 2
    x = jax.random.normal(k_x, (batch, in_planes, spatial, spatial), jnp.float32)
    params = init_params(k_p, in_planes, planes)
    ref = _ref_forward(x, params, stride)

    # bf16 MXU operands (default perf config), fp32 accumulation.
    fwd_bf16 = jax.jit(functools.partial(
        preact_block_wndrop_forward, stride=stride, compute_dtype=jnp.bfloat16))
    out = jax.block_until_ready(fwd_bf16(x, params))
    expected = (batch, planes, spatial // stride, spatial // stride)
    assert out.shape == expected, (out.shape, expected)
    assert bool(jnp.all(jnp.isfinite(out)))
    assert bool(jnp.allclose(out, ref, rtol=5e-2, atol=5e-2)), float(
        jnp.max(jnp.abs(out - ref)))

    # f32 operands: tighter numerical check of the same kernel structure.
    fwd_f32 = jax.jit(functools.partial(
        preact_block_wndrop_forward, stride=stride, compute_dtype=jnp.float32))
    out32 = jax.block_until_ready(fwd_f32(x, params))
    assert bool(jnp.allclose(out32, ref, rtol=2e-2, atol=2e-2)), float(
        jnp.max(jnp.abs(out32 - ref)))

    # Case 2: identity-shortcut block (stride=1, in_planes == planes).
    x2 = jax.random.normal(k_x2, (batch, planes, spatial, spatial), jnp.float32)
    params2 = init_params(k_p2, planes, planes)
    fwd_id = jax.jit(functools.partial(
        preact_block_wndrop_forward, stride=1, compute_dtype=jnp.float32))
    out_id = jax.block_until_ready(fwd_id(x2, params2))
    ref_id = _ref_forward(x2, params2, 1)
    assert out_id.shape == (batch, planes, spatial, spatial)
    assert bool(jnp.allclose(out_id, ref_id, rtol=2e-2, atol=2e-2)), float(
        jnp.max(jnp.abs(out_id - ref_id)))

    print("KERNEL_OK")
</pallas_src>

<mosaic_0001>
module attributes {stable_mosaic.version = 11 : i64} {
  func.func @kernel(%arg0: i32, %arg1: memref<1x16x16x4xf32, #tpu.memory_space<vmem>>, %arg2: memref<1x1x4xf32, #tpu.memory_space<vmem>>, %arg3: memref<1x1x4xf32, #tpu.memory_space<vmem>>, %arg4: memref<36x8xbf16, #tpu.memory_space<vmem>>, %arg5: memref<1x8xf32, #tpu.memory_space<vmem>>, %arg6: memref<72x8xbf16, #tpu.memory_space<vmem>>, %arg7: memref<4x8xbf16, #tpu.memory_space<vmem>>, %arg8: memref<1x8x8x8xf32, #tpu.memory_space<vmem>>, %arg9: memref<18x18x4xf32, #tpu.memory_space<vmem>>, %arg10: memref<64x36xf32, #tpu.memory_space<vmem>>, %arg11: memref<10x10x8xf32, #tpu.memory_space<vmem>>, %arg12: memref<64x72xf32, #tpu.memory_space<vmem>>) attributes {dimension_semantics = [#tpu.dimension_semantics<parallel>], iteration_bounds = array<i64: 2>, scalar_prefetch = 0 : i64, scratch_operands = 4 : i64, tpu.core_type = #tpu.core_type<tc>, window_params = [{transform_indices = @transform_0, window_bounds = array<i64: 1, 16, 16, 4>}, {pipeline_mode = #tpu.pipeline_mode<synchronous>, transform_indices = @transform_1, window_bounds = array<i64: 1, 1, 4>}, {pipeline_mode = #tpu.pipeline_mode<synchronous>, transform_indices = @transform_2, window_bounds = array<i64: 1, 1, 4>}, {pipeline_mode = #tpu.pipeline_mode<synchronous>, transform_indices = @transform_3, window_bounds = array<i64: 36, 8>}, {pipeline_mode = #tpu.pipeline_mode<synchronous>, transform_indices = @transform_4, window_bounds = array<i64: 1, 8>}, {pipeline_mode = #tpu.pipeline_mode<synchronous>, transform_indices = @transform_5, window_bounds = array<i64: 72, 8>}, {pipeline_mode = #tpu.pipeline_mode<synchronous>, transform_indices = @transform_6, window_bounds = array<i64: 4, 8>}, {transform_indices = @transform_7, window_bounds = array<i64: 1, 8, 8, 8>}]} {
    %cst = arith.constant 0.000000e+00 : f32
    %0 = vector.broadcast %cst : f32 to vector<1x18x4xf32>
    %c0 = arith.constant 0 : index
    %c0_0 = arith.constant 0 : index
    %c0_1 = arith.constant 0 : index
    %1 = vector.load %arg9[%c0, %c0_0, %c0_1] : memref<18x18x4xf32, #tpu.memory_space<vmem>>, vector<1x18x4xf32>
    tpu.vector_store %arg9[%c0, %c0_0, %c0_1], %0 {strides = array<i32>} : memref<18x18x4xf32, #tpu.memory_space<vmem>>, vector<1x18x4xf32>,
    %cst_2 = arith.constant 0.000000e+00 : f32
    %2 = vector.broadcast %cst_2 : f32 to vector<1x18x4xf32>
    %c17 = arith.constant 17 : index
    %c0_3 = arith.constant 0 : index
    %c0_4 = arith.constant 0 : index
    %3 = vector.load %arg9[%c17, %c0_3, %c0_4] : memref<18x18x4xf32, #tpu.memory_space<vmem>>, vector<1x18x4xf32>
    tpu.vector_store %arg9[%c17, %c0_3, %c0_4], %2 {strides = array<i32>} : memref<18x18x4xf32, #tpu.memory_space<vmem>>, vector<1x18x4xf32>,
    %cst_5 = arith.constant 0.000000e+00 : f32
    %4 = vector.broadcast %cst_5 : f32 to vector<18x1x4xf32>
    %c0_6 = arith.constant 0 : index
    %c0_7 = arith.constant 0 : index
    %c0_8 = arith.constant 0 : index
    %5 = vector.load %arg9[%c0_6, %c0_7, %c0_8] : memref<18x18x4xf32, #tpu.memory_space<vmem>>, vector<18x1x4xf32>
    tpu.vector_store %arg9[%c0_6, %c0_7, %c0_8], %4 {strides = array<i32>} : memref<18x18x4xf32, #tpu.memory_space<vmem>>, vector<18x1x4xf32>,
    %cst_9 = arith.constant 0.000000e+00 : f32
    %6 = vector.broadcast %cst_9 : f32 to vector<18x1x4xf32>
    %c0_10 = arith.constant 0 : index
    %c17_11 = arith.constant 17 : index
    %c0_12 = arith.constant 0 : index
    %7 = vector.load %arg9[%c0_10, %c17_11, %c0_12] : memref<18x18x4xf32, #tpu.memory_space<vmem>>, vector<18x1x4xf32>
    tpu.vector_store %arg9[%c0_10, %c17_11, %c0_12], %6 {strides = array<i32>} : memref<18x18x4xf32, #tpu.memory_space<vmem>>, vector<18x1x4xf32>,
    %c0_13 = arith.constant 0 : index
    %c0_14 = arith.constant 0 : index
    %c0_15 = arith.constant 0 : index
    %c0_16 = arith.constant 0 : index
    %8 = vector.load %arg1[%c0_13, %c0_14, %c0_15, %c0_16] : memref<1x16x16x4xf32, #tpu.memory_space<vmem>>, vector<1x16x16x4xf32>
    %9 = vector.shape_cast %8 : vector<1x16x16x4xf32> to vector<16x16x4xf32>
    %c0_17 = arith.constant 0 : index
    %c0_18 = arith.constant 0 : index
    %c0_19 = arith.constant 0 : index
    %10 = vector.load %arg2[%c0_17, %c0_18, %c0_19] : memref<1x1x4xf32, #tpu.memory_space<vmem>>, vector<1x1x4xf32>
    %11 = vector.broadcast %10 : vector<1x1x4xf32> to vector<16x16x4xf32>
    %12 = arith.mulf %9, %11 : vector<16x16x4xf32>
    %c0_20 = arith.constant 0 : index
    %c0_21 = arith.constant 0 : index
    %c0_22 = arith.constant 0 : index
    %13 = vector.load %arg3[%c0_20, %c0_21, %c0_22] : memref<1x1x4xf32, #tpu.memory_space<vmem>>, vector<1x1x4xf32>
    %14 = vector.broadcast %13 : vector<1x1x4xf32> to vector<16x16x4xf32>
    %15 = arith.addf %12, %14 : vector<16x16x4xf32>
    %cst_23 = arith.constant 0.000000e+00 : f32
    %16 = vector.broadcast %cst_23 : f32 to vector<16x16x4xf32>
    %17 = arith.maximumf %15, %16 : vector<16x16x4xf32>
    %c1 = arith.constant 1 : index
    %c1_24 = arith.constant 1 : index
    %c0_25 = arith.constant 0 : index
    %18 = vector.load %arg9[%c1, %c1_24, %c0_25] : memref<18x18x4xf32, #tpu.memory_space<vmem>>, vector<16x16x4xf32>
    tpu.vector_store %arg9[%c1, %c1_24, %c0_25], %17 {strides = array<i32>} : memref<18x18x4xf32, #tpu.memory_space<vmem>>, vector<16x16x4xf32>,
    %c0_26 = arith.constant 0 : index
    %c0_27 = arith.constant 0 : index
    %c0_28 = arith.constant 0 : index
    %19 = tpu.strided_load %arg9[%c0_26, %c0_27, %c0_28] {strides = array<i32: 2, 2, 1>} : memref<18x18x4xf32, #tpu.memory_space<vmem>>, vector<8x8x4xf32>
    %20 = vector.shape_cast %19 : vector<8x8x4xf32> to vector<64x4xf32>
    %c0_29 = arith.constant 0 : index
    %c0_30 = arith.constant 0 : index
    %21 = vector.load %arg10[%c0_29, %c0_30] : memref<64x36xf32, #tpu.memory_space<vmem>>, vector<64x4xf32>
    tpu.vector_store %arg10[%c0_29, %c0_30], %20 {strides = array<i32>} : memref<64x36xf32, #tpu.memory_space<vmem>>, vector<64x4xf32>,
    %c0_31 = arith.constant 0 : index
    %c1_32 = arith.constant 1 : index
    %c0_33 = arith.constant 0 : index
    %22 = tpu.strided_load %arg9[%c0_31, %c1_32, %c0_33] {strides = array<i32: 2, 2, 1>} : memref<18x18x4xf32, #tpu.memory_space<vmem>>, vector<8x8x4xf32>
    %23 = vector.shape_cast %22 : vector<8x8x4xf32> to vector<64x4xf32>
    %c0_34 = arith.constant 0 : index
    %c4 = arith.constant 4 : index
    %24 = vector.load %arg10[%c0_34, %c4] : memref<64x36xf32, #tpu.memory_space<vmem>>, vector<64x4xf32>
    tpu.vector_store %arg10[%c0_34, %c4], %23 {strides = array<i32>} : memref<64x36xf32, #tpu.memory_space<vmem>>, vector<64x4xf32>,
    %c0_35 = arith.constant 0 : index
    %c2 = arith.constant 2 : index
    %c0_36 = arith.constant 0 : index
    %25 = tpu.strided_load %arg9[%c0_35, %c2, %c0_36] {strides = array<i32: 2, 2, 1>} : memref<18x18x4xf32, #tpu.memory_space<vmem>>, vector<8x8x4xf32>
    %26 = vector.shape_cast %25 : vector<8x8x4xf32> to vector<64x4xf32>
    %c0_37 = arith.constant 0 : index
    %c8 = arith.constant 8 : index
    %27 = vector.load %arg10[%c0_37, %c8] : memref<64x36xf32, #tpu.memory_space<vmem>>, vector<64x4xf32>
    tpu.vector_store %arg10[%c0_37, %c8], %26 {strides = array<i32>} : memref<64x36xf32, #tpu.memory_space<vmem>>, vector<64x4xf32>,
    %c1_38 = arith.constant 1 : index
    %c0_39 = arith.constant 0 : index
    %c0_40 = arith.constant 0 : index
    %28 = tpu.strided_load %arg9[%c1_38, %c0_39, %c0_40] {strides = array<i32: 2, 2, 1>} : memref<18x18x4xf32, #tpu.memory_space<vmem>>, vector<8x8x4xf32>
    %29 = vector.shape_cast %28 : vector<8x8x4xf32> to vector<64x4xf32>
    %c0_41 = arith.constant 0 : index
    %c12 = arith.constant 12 : index
    %30 = vector.load %arg10[%c0_41, %c12] : memref<64x36xf32, #tpu.memory_space<vmem>>, vector<64x4xf32>
    tpu.vector_store %arg10[%c0_41, %c12], %29 {strides = array<i32>} : memref<64x36xf32, #tpu.memory_space<vmem>>, vector<64x4xf32>,
    %c1_42 = arith.constant 1 : index
    %c1_43 = arith.constant 1 : index
    %c0_44 = arith.constant 0 : index
    %31 = tpu.strided_load %arg9[%c1_42, %c1_43, %c0_44] {strides = array<i32: 2, 2, 1>} : memref<18x18x4xf32, #tpu.memory_space<vmem>>, vector<8x8x4xf32>
    %32 = vector.shape_cast %31 : vector<8x8x4xf32> to vector<64x4xf32>
    %c0_45 = arith.constant 0 : index
    %c16 = arith.constant 16 : index
    %33 = vector.load %arg10[%c0_45, %c16] : memref<64x36xf32, #tpu.memory_space<vmem>>, vector<64x4xf32>
    tpu.vector_store %arg10[%c0_45, %c16], %32 {strides = array<i32>} : memref<64x36xf32, #tpu.memory_space<vmem>>, vector<64x4xf32>,
    %c1_46 = arith.constant 1 : index
    %c2_47 = arith.constant 2 : index
    %c0_48 = arith.constant 0 : index
    %34 = tpu.strided_load %arg9[%c1_46, %c2_47, %c0_48] {strides = array<i32: 2, 2, 1>} : memref<18x18x4xf32, #tpu.memory_space<vmem>>, vector<8x8x4xf32>
    %35 = vector.shape_cast %34 : vector<8x8x4xf32> to vector<64x4xf32>
    %c0_49 = arith.constant 0 : index
    %c20 = arith.constant 20 : index
    %36 = vector.load %arg10[%c0_49, %c20] : memref<64x36xf32, #tpu.memory_space<vmem>>, vector<64x4xf32>
    tpu.vector_store %arg10[%c0_49, %c20], %35 {strides = array<i32>} : memref<64x36xf32, #tpu.memory_space<vmem>>, vector<64x4xf32>,
    %c2_50 = arith.constant 2 : index
    %c0_51 = arith.constant 0 : index
    %c0_52 = arith.constant 0 : index
    %37 = tpu.strided_load %arg9[%c2_50, %c0_51, %c0_52] {strides = array<i32: 2, 2, 1>} : memref<18x18x4xf32, #tpu.memory_space<vmem>>, vector<8x8x4xf32>
    %38 = vector.shape_cast %37 : vector<8x8x4xf32> to vector<64x4xf32>
    %c0_53 = arith.constant 0 : index
    %c24 = arith.constant 24 : index
    %39 = vector.load %arg10[%c0_53, %c24] : memref<64x36xf32, #tpu.memory_space<vmem>>, vector<64x4xf32>
    tpu.vector_store %arg10[%c0_53, %c24], %38 {strides = array<i32>} : memref<64x36xf32, #tpu.memory_space<vmem>>, vector<64x4xf32>,
    %c2_54 = arith.constant 2 : index
    %c1_55 = arith.constant 1 : index
    %c0_56 = arith.constant 0 : index
    %40 = tpu.strided_load %arg9[%c2_54, %c1_55, %c0_56] {strides = array<i32: 2, 2, 1>} : memref<18x18x4xf32, #tpu.memory_space<vmem>>, vector<8x8x4xf32>
    %41 = vector.shape_cast %40 : vector<8x8x4xf32> to vector<64x4xf32>
    %c0_57 = arith.constant 0 : index
    %c28 = arith.constant 28 : index
    %42 = vector.load %arg10[%c0_57, %c28] : memref<64x36xf32, #tpu.memory_space<vmem>>, vector<64x4xf32>
    tpu.vector_store %arg10[%c0_57, %c28], %41 {strides = array<i32>} : memref<64x36xf32, #tpu.memory_space<vmem>>, vector<64x4xf32>,
    %c2_58 = arith.constant 2 : index
    %c2_59 = arith.constant 2 : index
    %c0_60 = arith.constant 0 : index
    %43 = tpu.strided_load %arg9[%c2_58, %c2_59, %c0_60] {strides = array<i32: 2, 2, 1>} : memref<18x18x4xf32, #tpu.memory_space<vmem>>, vector<8x8x4xf32>
    %44 = vector.shape_cast %43 : vector<8x8x4xf32> to vector<64x4xf32>
    %c0_61 = arith.constant 0 : index
    %c32 = arith.constant 32 : index
    %45 = vector.load %arg10[%c0_61, %c32] : memref<64x36xf32, #tpu.memory_space<vmem>>, vector<64x4xf32>
    tpu.vector_store %arg10[%c0_61, %c32], %44 {strides = array<i32>} : memref<64x36xf32, #tpu.memory_space<vmem>>, vector<64x4xf32>,
    %c0_62 = arith.constant 0 : index
    %c0_63 = arith.constant 0 : index
    %46 = vector.load %arg10[%c0_62, %c0_63] : memref<64x36xf32, #tpu.memory_space<vmem>>, vector<64x36xf32>
    %47 = arith.truncf %46 : vector<64x36xf32> to vector<64x36xbf16>
    %c0_64 = arith.constant 0 : index
    %c0_65 = arith.constant 0 : index
    %48 = vector.load %arg4[%c0_64, %c0_65] : memref<36x8xbf16, #tpu.memory_space<vmem>>, vector<36x8xbf16>
    %cst_66 = arith.constant dense<0.000000e+00> : vector<64x8xf32>
    %49 = tpu.matmul %47, %48, %cst_66 {dimension_numbers = #tpu.dot_dimension_numbers<[1], [0], [0], [1], [0, 0, 1, 1], [], []>} : vector<64x36xbf16>, vector<36x8xbf16>, vector<64x8xf32> -> vector<64x8xf32>
    %50 = arith.truncf %32 : vector<64x4xf32> to vector<64x4xbf16>
    %c0_67 = arith.constant 0 : index
    %c0_68 = arith.constant 0 : index
    %51 = vector.load %arg7[%c0_67, %c0_68] : memref<4x8xbf16, #tpu.memory_space<vmem>>, vector<4x8xbf16>
    %cst_69 = arith.constant dense<0.000000e+00> : vector<64x8xf32>
    %52 = tpu.matmul %50, %51, %cst_69 {dimension_numbers = #tpu.dot_dimension_numbers<[1], [0], [0], [1], [0, 0, 1, 1], [], []>} : vector<64x4xbf16>, vector<4x8xbf16>, vector<64x8xf32> -> vector<64x8xf32>
    %c0_70 = arith.constant 0 : index
    %c0_71 = arith.constant 0 : index
    %53 = vector.load %arg5[%c0_70, %c0_71] : memref<1x8xf32, #tpu.memory_space<vmem>>, vector<1x8xf32>
    %54 = vector.broadcast %53 : vector<1x8xf32> to vector<64x8xf32>
    %55 = arith.addf %49, %54 : vector<64x8xf32>
    %cst_72 = arith.constant 0.000000e+00 : f32
    %56 = vector.broadcast %cst_72 : f32 to vector<64x8xf32>
    %57 = arith.maximumf %55, %56 : vector<64x8xf32>
    %cst_73 = arith.constant 0.000000e+00 : f32
    %58 = vector.broadcast %cst_73 : f32 to vector<1x10x8xf32>
    %c0_74 = arith.constant 0 : index
    %c0_75 = arith.constant 0 : index
    %c0_76 = arith.constant 0 : index
    %59 = vector.load %arg11[%c0_74, %c0_75, %c0_76] : memref<10x10x8xf32, #tpu.memory_space<vmem>>, vector<1x10x8xf32>
    tpu.vector_store %arg11[%c0_74, %c0_75, %c0_76], %58 {strides = array<i32>} : memref<10x10x8xf32, #tpu.memory_space<vmem>>, vector<1x10x8xf32>,
    %cst_77 = arith.constant 0.000000e+00 : f32
    %60 = vector.broadcast %cst_77 : f32 to vector<1x10x8xf32>
    %c9 = arith.constant 9 : index
    %c0_78 = arith.constant 0 : index
    %c0_79 = arith.constant 0 : index
    %61 = vector.load %arg11[%c9, %c0_78, %c0_79] : memref<10x10x8xf32, #tpu.memory_space<vmem>>, vector<1x10x8xf32>
    tpu.vector_store %arg11[%c9, %c0_78, %c0_79], %60 {strides = array<i32>} : memref<10x10x8xf32, #tpu.memory_space<vmem>>, vector<1x10x8xf32>,
    %cst_80 = arith.constant 0.000000e+00 : f32
    %62 = vector.broadcast %cst_80 : f32 to vector<10x1x8xf32>
    %c0_81 = arith.constant 0 : index
    %c0_82 = arith.constant 0 : index
    %c0_83 = arith.constant 0 : index
    %63 = vector.load %arg11[%c0_81, %c0_82, %c0_83] : memref<10x10x8xf32, #tpu.memory_space<vmem>>, vector<10x1x8xf32>
    tpu.vector_store %arg11[%c0_81, %c0_82, %c0_83], %62 {strides = array<i32>} : memref<10x10x8xf32, #tpu.memory_space<vmem>>, vector<10x1x8xf32>,
    %cst_84 = arith.constant 0.000000e+00 : f32
    %64 = vector.broadcast %cst_84 : f32 to vector<10x1x8xf32>
    %c0_85 = arith.constant 0 : index
    %c9_86 = arith.constant 9 : index
    %c0_87 = arith.constant 0 : index
    %65 = vector.load %arg11[%c0_85, %c9_86, %c0_87] : memref<10x10x8xf32, #tpu.memory_space<vmem>>, vector<10x1x8xf32>
    tpu.vector_store %arg11[%c0_85, %c9_86, %c0_87], %64 {strides = array<i32>} : memref<10x10x8xf32, #tpu.memory_space<vmem>>, vector<10x1x8xf32>,
    %66 = vector.shape_cast %57 : vector<64x8xf32> to vector<8x8x8xf32>
    %c1_88 = arith.constant 1 : index
    %c1_89 = arith.constant 1 : index
    %c0_90 = arith.constant 0 : index
    %67 = vector.load %arg11[%c1_88, %c1_89, %c0_90] : memref<10x10x8xf32, #tpu.memory_space<vmem>>, vector<8x8x8xf32>
    tpu.vector_store %arg11[%c1_88, %c1_89, %c0_90], %66 {strides = array<i32>} : memref<10x10x8xf32, #tpu.memory_space<vmem>>, vector<8x8x8xf32>,
    %c0_91 = arith.constant 0 : index
    %c0_92 = arith.constant 0 : index
    %c0_93 = arith.constant 0 : index
    %68 = vector.load %arg11[%c0_91, %c0_92, %c0_93] : memref<10x10x8xf32, #tpu.memory_space<vmem>>, vector<8x8x8xf32>
    %69 = vector.shape_cast %68 : vector<8x8x8xf32> to vector<64x8xf32>
    %c0_94 = arith.constant 0 : index
    %c0_95 = arith.constant 0 : index
    %70 = vector.load %arg12[%c0_94, %c0_95] : memref<64x72xf32, #tpu.memory_space<vmem>>, vector<64x8xf32>
    tpu.vector_store %arg12[%c0_94, %c0_95], %69 {strides = array<i32>} : memref<64x72xf32, #tpu.memory_space<vmem>>, vector<64x8xf32>,
    %c0_96 = arith.constant 0 : index
    %c1_97 = arith.constant 1 : index
    %c0_98 = arith.constant 0 : index
    %71 = vector.load %arg11[%c0_96, %c1_97, %c0_98] : memref<10x10x8xf32, #tpu.memory_space<vmem>>, vector<8x8x8xf32>
    %72 = vector.shape_cast %71 : vector<8x8x8xf32> to vector<64x8xf32>
    %c0_99 = arith.constant 0 : index
    %c8_100 = arith.constant 8 : index
    %73 = vector.load %arg12[%c0_99, %c8_100] : memref<64x72xf32, #tpu.memory_space<vmem>>, vector<64x8xf32>
    tpu.vector_store %arg12[%c0_99, %c8_100], %72 {strides = array<i32>} : memref<64x72xf32, #tpu.memory_space<vmem>>, vector<64x8xf32>,
    %c0_101 = arith.constant 0 : index
    %c2_102 = arith.constant 2 : index
    %c0_103 = arith.constant 0 : index
    %74 = vector.load %arg11[%c0_101, %c2_102, %c0_103] : memref<10x10x8xf32, #tpu.memory_space<vmem>>, vector<8x8x8xf32>
    %75 = vector.shape_cast %74 : vector<8x8x8xf32> to vector<64x8xf32>
    %c0_104 = arith.constant 0 : index
    %c16_105 = arith.constant 16 : index
    %76 = vector.load %arg12[%c0_104, %c16_105] : memref<64x72xf32, #tpu.memory_space<vmem>>, vector<64x8xf32>
    tpu.vector_store %arg12[%c0_104, %c16_105], %75 {strides = array<i32>} : memref<64x72xf32, #tpu.memory_space<vmem>>, vector<64x8xf32>,
    %c1_106 = arith.constant 1 : index
    %c0_107 = arith.constant 0 : index
    %c0_108 = arith.constant 0 : index
    %77 = vector.load %arg11[%c1_106, %c0_107, %c0_108] : memref<10x10x8xf32, #tpu.memory_space<vmem>>, vector<8x8x8xf32>
    %78 = vector.shape_cast %77 : vector<8x8x8xf32> to vector<64x8xf32>
    %c0_109 = arith.constant 0 : index
    %c24_110 = arith.constant 24 : index
    %79 = vector.load %arg12[%c0_109, %c24_110] : memref<64x72xf32, #tpu.memory_space<vmem>>, vector<64x8xf32>
    tpu.vector_store %arg12[%c0_109, %c24_110], %78 {strides = array<i32>} : memref<64x72xf32, #tpu.memory_space<vmem>>, vector<64x8xf32>,
    %c1_111 = arith.constant 1 : index
    %c1_112 = arith.constant 1 : index
    %c0_113 = arith.constant 0 : index
    %80 = vector.load %arg11[%c1_111, %c1_112, %c0_113] : memref<10x10x8xf32, #tpu.memory_space<vmem>>, vector<8x8x8xf32>
    %81 = vector.shape_cast %80 : vector<8x8x8xf32> to vector<64x8xf32>
    %c0_114 = arith.constant 0 : index
    %c32_115 = arith.constant 32 : index
    %82 = vector.load %arg12[%c0_114, %c32_115] : memref<64x72xf32, #tpu.memory_space<vmem>>, vector<64x8xf32>
    tpu.vector_store %arg12[%c0_114, %c32_115], %81 {strides = array<i32>} : memref<64x72xf32, #tpu.memory_space<vmem>>, vector<64x8xf32>,
    %c1_116 = arith.constant 1 : index
    %c2_117 = arith.constant 2 : index
    %c0_118 = arith.constant 0 : index
    %83 = vector.load %arg11[%c1_116, %c2_117, %c0_118] : memref<10x10x8xf32, #tpu.memory_space<vmem>>, vector<8x8x8xf32>
    %84 = vector.shape_cast %83 : vector<8x8x8xf32> to vector<64x8xf32>
    %c0_119 = arith.constant 0 : index
    %c40 = arith.constant 40 : index
    %85 = vector.load %arg12[%c0_119, %c40] : memref<64x72xf32, #tpu.memory_space<vmem>>, vector<64x8xf32>
    tpu.vector_store %arg12[%c0_119, %c40], %84 {strides = array<i32>} : memref<64x72xf32, #tpu.memory_space<vmem>>, vector<64x8xf32>,
    %c2_120 = arith.constant 2 : index
    %c0_121 = arith.constant 0 : index
    %c0_122 = arith.constant 0 : index
    %86 = vector.load %arg11[%c2_120, %c0_121, %c0_122] : memref<10x10x8xf32, #tpu.memory_space<vmem>>, vector<8x8x8xf32>
    %87 = vector.shape_cast %86 : vector<8x8x8xf32> to vector<64x8xf32>
    %c0_123 = arith.constant 0 : index
    %c48 = arith.constant 48 : index
    %88 = vector.load %arg12[%c0_123, %c48] : memref<64x72xf32, #tpu.memory_space<vmem>>, vector<64x8xf32>
    tpu.vector_store %arg12[%c0_123, %c48], %87 {strides = array<i32>} : memref<64x72xf32, #tpu.memory_space<vmem>>, vector<64x8xf32>,
    %c2_124 = arith.constant 2 : index
    %c1_125 = arith.constant 1 : index
    %c0_126 = arith.constant 0 : index
    %89 = vector.load %arg11[%c2_124, %c1_125, %c0_126] : memref<10x10x8xf32, #tpu.memory_space<vmem>>, vector<8x8x8xf32>
    %90 = vector.shape_cast %89 : vector<8x8x8xf32> to vector<64x8xf32>
    %c0_127 = arith.constant 0 : index
    %c56 = arith.constant 56 : index
    %91 = vector.load %arg12[%c0_127, %c56] : memref<64x72xf32, #tpu.memory_space<vmem>>, vector<64x8xf32>
    tpu.vector_store %arg12[%c0_127, %c56], %90 {strides = array<i32>} : memref<64x72xf32, #tpu.memory_space<vmem>>, vector<64x8xf32>,
    %c2_128 = arith.constant 2 : index
    %c2_129 = arith.constant 2 : index
    %c0_130 = arith.constant 0 : index
    %92 = vector.load %arg11[%c2_128, %c2_129, %c0_130] : memref<10x10x8xf32, #tpu.memory_space<vmem>>, vector<8x8x8xf32>
    %93 = vector.shape_cast %92 : vector<8x8x8xf32> to vector<64x8xf32>
    %c0_131 = arith.constant 0 : index
    %c64 = arith.constant 64 : index
    %94 = vector.load %arg12[%c0_131, %c64] : memref<64x72xf32, #tpu.memory_space<vmem>>, vector<64x8xf32>
    tpu.vector_store %arg12[%c0_131, %c64], %93 {strides = array<i32>} : memref<64x72xf32, #tpu.memory_space<vmem>>, vector<64x8xf32>,
    %c0_132 = arith.constant 0 : index
    %c0_133 = arith.constant 0 : index
    %95 = vector.load %arg12[%c0_132, %c0_133] : memref<64x72xf32, #tpu.memory_space<vmem>>, vector<64x72xf32>
    %96 = arith.truncf %95 : vector<64x72xf32> to vector<64x72xbf16>
    %c0_134 = arith.constant 0 : index
    %c0_135 = arith.constant 0 : index
    %97 = vector.load %arg6[%c0_134, %c0_135] : memref<72x8xbf16, #tpu.memory_space<vmem>>, vector<72x8xbf16>
    %cst_136 = arith.constant dense<0.000000e+00> : vector<64x8xf32>
    %98 = tpu.matmul %96, %97, %cst_136 {dimension_numbers = #tpu.dot_dimension_numbers<[1], [0], [0], [1], [0, 0, 1, 1], [], []>} : vector<64x72xbf16>, vector<72x8xbf16>, vector<64x8xf32> -> vector<64x8xf32>
    %99 = arith.addf %52, %98 : vector<64x8xf32>
    %100 = vector.shape_cast %99 : vector<64x8xf32> to vector<8x8x8xf32>
    %c0_137 = arith.constant 0 : index
    %c0_138 = arith.constant 0 : index
    %c0_139 = arith.constant 0 : index
    %c0_140 = arith.constant 0 : index
    %101 = vector.load %arg8[%c0_137, %c0_138, %c0_139, %c0_140] : memref<1x8x8x8xf32, #tpu.memory_space<vmem>>, vector<1x8x8x8xf32>
    %102 = vector.shape_cast %101 : vector<1x8x8x8xf32> to vector<8x8x8xf32>
    %103 = vector.shape_cast %100 : vector<8x8x8xf32> to vector<1x8x8x8xf32>
    tpu.vector_store %arg8[%c0_137, %c0_138, %c0_139, %c0_140], %103 {strides = array<i32>} : memref<1x8x8x8xf32, #tpu.memory_space<vmem>>, vector<1x8x8x8xf32>,
    return
  }
  func.func @transform_0(%arg0: i32) -> (i32, i32, i32, i32) {
    %c0_i32 = arith.constant 0 : i32
    %c0_i32_0 = arith.constant 0 : i32
    %c0_i32_1 = arith.constant 0 : i32
    %c0_i32_2 = arith.constant 0 : i32
    return %arg0, %c0_i32, %c0_i32_0, %c0_i32_1 : i32, i32, i32, i32
  }
  func.func @transform_1(%arg0: i32) -> (i32, i32, i32) {
    %c0_i32 = arith.constant 0 : i32
    %c0_i32_0 = arith.constant 0 : i32
    %c0_i32_1 = arith.constant 0 : i32
    %c0_i32_2 = arith.constant 0 : i32
    return %c0_i32, %c0_i32_0, %c0_i32_1 : i32, i32, i32
  }
  func.func @transform_2(%arg0: i32) -> (i32, i32, i32) {
    %c0_i32 = arith.constant 0 : i32
    %c0_i32_0 = arith.constant 0 : i32
    %c0_i32_1 = arith.constant 0 : i32
    %c0_i32_2 = arith.constant 0 : i32
    return %c0_i32, %c0_i32_0, %c0_i32_1 : i32, i32, i32
  }
  func.func @transform_3(%arg0: i32) -> (i32, i32) {
    %c0_i32 = arith.constant 0 : i32
    %c0_i32_0 = arith.constant 0 : i32
    %c0_i32_1 = arith.constant 0 : i32
    return %c0_i32, %c0_i32_0 : i32, i32
  }
  func.func @transform_4(%arg0: i32) -> (i32, i32) {
    %c0_i32 = arith.constant 0 : i32
    %c0_i32_0 = arith.constant 0 : i32
    %c0_i32_1 = arith.constant 0 : i32
    return %c0_i32, %c0_i32_0 : i32, i32
  }
  func.func @transform_5(%arg0: i32) -> (i32, i32) {
    %c0_i32 = arith.constant 0 : i32
    %c0_i32_0 = arith.constant 0 : i32
    %c0_i32_1 = arith.constant 0 : i32
    return %c0_i32, %c0_i32_0 : i32, i32
  }
  func.func @transform_6(%arg0: i32) -> (i32, i32) {
    %c0_i32 = arith.constant 0 : i32
    %c0_i32_0 = arith.constant 0 : i32
    %c0_i32_1 = arith.constant 0 : i32
    return %c0_i32, %c0_i32_0 : i32, i32
  }
  func.func @transform_7(%arg0: i32) -> (i32, i32, i32, i32) {
    %c0_i32 = arith.constant 0 : i32
    %c0_i32_0 = arith.constant 0 : i32
    %c0_i32_1 = arith.constant 0 : i32
    %c0_i32_2 = arith.constant 0 : i32
    return %arg0, %c0_i32, %c0_i32_0, %c0_i32_1 : i32, i32, i32, i32
  }
}

</mosaic_0001>

<llo_original>
// kernel: preact_block_wndrop_forward.1
$region0: #{preact_block_wndrop_forward.1}
  #allocation0 [shape = 'u32[]', space=smem, size = 0x4, offset = 0x4, fixed_abs, tag = 'smem constant byte address 0x4 - core index']
  #allocation1 [shape = 'u32[72,128]{1,0:T(1,128)}', space=vmem, size = 0x9000, scoped, tag = 'internal scratch']
  #allocation2 [shape = 'f32[18,18,4]{2,1,0:T(8,128)}', space=vmem, size = 0x36000, scoped, tag = 'scratch operand']
  #allocation3 [shape = 'f32[64,36]{1,0:T(8,128)}', space=vmem, size = 0x8000, scoped, tag = 'scratch operand']
  #allocation4 [shape = 'f32[10,10,8]{2,1,0:T(8,128)}', space=vmem, size = 0x14000, scoped, tag = 'scratch operand']
  #allocation5 [shape = 'f32[64,72]{1,0:T(8,128)}', space=vmem, size = 0x8000, scoped, tag = 'scratch operand']
  %s0 = inlined_call_operand.vmem [shape: f32[2,16,16,4], index: 0, kind: input, shape index: {}]
  %s1 = inlined_call_operand.vmem [shape: f32[1,1,4], index: 1, kind: input, shape index: {}]
  %s2 = inlined_call_operand.vmem [shape: f32[1,1,4], index: 2, kind: input, shape index: {}]
  %s3 = inlined_call_operand.vmem [shape: bf16[36,8], index: 3, kind: input, shape index: {}]
  %s4 = inlined_call_operand.vmem [shape: f32[1,8], index: 4, kind: input, shape index: {}]
  %s5 = inlined_call_operand.vmem [shape: bf16[72,8], index: 5, kind: input, shape index: {}]
  %s6 = inlined_call_operand.vmem [shape: bf16[4,8], index: 6, kind: input, shape index: {}]
  %s7 = inlined_call_operand.vmem [shape: f32[2,8,8,8], index: 7, kind: output, shape index: {}]
  %s8 = sld [smem:[#allocation0]]
  $region61: #{preact_block_wndrop_forward.1} parent=0
    _
  %s10 = ssub.s32 1, %s8
  %s11 = scalar_select 0, %s10, %s8
  loop: start=0, step=1, limit=4
  $region2: #{preact_block_wndrop_forward.1} parent=0 // loop_pre_header
    _
  $region3: #{preact_block_wndrop_forward.1} parent=0 // loop_header
    %s13 = sphi 0, %s17
    %p14 = scmp.ge.s32.totalorder %s13, 4
    %s23 = sphi 0, %s25
    %s26 = sphi 0, %s23
    %s27 = sphi 0, %s26
    %s43 = sphi 0, %s27
    %s47 = sphi 0, %s47
    %s49 = sphi 0, %s47
    %s50 = sphi 0, %s49
    %s64 = sphi 0, %s50
    %s68 = sphi 0, %s68
    %s70 = sphi 0, %s68
    %s71 = sphi 0, %s70
    %s85 = sphi 0, %s71
    %s89 = sphi 0, %s89
    %s91 = sphi 0, %s89
    %s92 = sphi 0, %s91
    %s106 = sphi 0, %s92
    %s110 = sphi 0, %s110
    %s112 = sphi 0, %s110
    %s113 = sphi 0, %s112
    %s127 = sphi 0, %s113
    %s131 = sphi 0, %s131
    %s133 = sphi 0, %s131
    %s134 = sphi 0, %s133
    %s148 = sphi 0, %s134
    %s152 = sphi 0, %s152
    %s154 = sphi 0, %s152
    %s155 = sphi 0, %s154
    %s169 = sphi 0, %s155
    %s175 = sphi 0, %s177
    %s178 = sphi 0, %s175
    %s179 = sphi 0, %s178
    %s195 = sphi 0, %s179
  $region4: #{preact_block_wndrop_forward.1} parent=0 // loop_header_branch
    %16 = sbr.rel (%p14) target = $region8
  $region5: #{preact_block_wndrop_forward.1} parent=0 // loop_body
    %s18 = ssub.s32 %s13, 1
    %s19 = ssub.s32 %s13, 2
    %s20 = sadd.s32 %s13, 1
    %s21 = ssub.s32 %s13, %s20
    %p22 = scmp.eq.s32.totalorder %s21, 0
    %s24 = sadd.s32 %s23, 1
    %s25 = scalar_select %p22, %s23, %s24
    %p28 = pneg %p22
    %p29 = scmp.eq.s32.totalorder %s13, 1
    %p30 = por %p28, %p29
    %p31 = scmp.ne.s32.totalorder %s23, %s26
    %p32 = scmp.eq.s32.totalorder %s13, 0
    %p33 = por %p31, %p32
    %p34 = scmp.ne.s32.totalorder %s23, %s26
    %p35 = scmp.eq.s32.totalorder %s18, 1
    %p36 = por %p34, %p35
    %p37 = scmp.ne.s32.totalorder %s26, %s27
    %p38 = scmp.eq.s32.totalorder %s18, 0
    %p39 = por %p37, %p38
    %p40 = scmp.ne.s32.totalorder %s26, %s27
    %p41 = scmp.eq.s32.totalorder %s19, 1
    %p42 = por %p40, %p41
    %p44 = scmp.ne.s32.totalorder %s27, %s43
    %p45 = scmp.eq.s32.totalorder %s19, 0
    %p46 = por %p44, %p45
    %s48 = sadd.s32 %s47, 1
    %p51 = scmp.eq.s32.totalorder %s13, 1
    %p52 = scmp.ne.s32.totalorder %s47, %s49
    %p53 = scmp.eq.s32.totalorder %s13, 0
    %p54 = por %p52, %p53
    %p55 = scmp.ne.s32.totalorder %s47, %s49
    %p56 = scmp.eq.s32.totalorder %s18, 1
    %p57 = por %p55, %p56
    %p58 = scmp.ne.s32.totalorder %s49, %s50
    %p59 = scmp.eq.s32.totalorder %s18, 0
    %p60 = por %p58, %p59
    %p61 = scmp.ne.s32.totalorder %s49, %s50
    %p62 = scmp.eq.s32.totalorder %s19, 1
    %p63 = por %p61, %p62
    %p65 = scmp.ne.s32.totalorder %s50, %s64
    %p66 = scmp.eq.s32.totalorder %s19, 0
    %p67 = por %p65, %p66
    %s69 = sadd.s32 %s68, 1
    %p72 = scmp.eq.s32.totalorder %s13, 1
    %p73 = scmp.ne.s32.totalorder %s68, %s70
    %p74 = scmp.eq.s32.totalorder %s13, 0
    %p75 = por %p73, %p74
    %p76 = scmp.ne.s32.totalorder %s68, %s70
    %p77 = scmp.eq.s32.totalorder %s18, 1
    %p78 = por %p76, %p77
    %p79 = scmp.ne.s32.totalorder %s70, %s71
    %p80 = scmp.eq.s32.totalorder %s18, 0
    %p81 = por %p79, %p80
    %p82 = scmp.ne.s32.totalorder %s70, %s71
    %p83 = scmp.eq.s32.totalorder %s19, 1
    %p84 = por %p82, %p83
    %p86 = scmp.ne.s32.totalorder %s71, %s85
    %p87 = scmp.eq.s32.totalorder %s19, 0
    %p88 = por %p86, %p87
    %s90 = sadd.s32 %s89, 1
    %p93 = scmp.eq.s32.totalorder %s13, 1
    %p94 = scmp.ne.s32.totalorder %s89, %s91
    %p95 = scmp.eq.s32.totalorder %s13, 0
    %p96 = por %p94, %p95
    %p97 = scmp.ne.s32.totalorder %s89, %s91
    %p98 = scmp.eq.s32.totalorder %s18, 1
    %p99 = por %p97, %p98
    %p100 = scmp.ne.s32.totalorder %s91, %s92
    %p101 = scmp.eq.s32.totalorder %s18, 0
    %p102 = por %p100, %p101
    %p103 = scmp.ne.s32.totalorder %s91, %s92
    %p104 = scmp.eq.s32.totalorder %s19, 1
    %p105 = por %p103, %p104
    %p107 = scmp.ne.s32.totalorder %s92, %s106
    %p108 = scmp.eq.s32.totalorder %s19, 0
    %p109 = por %p107, %p108
    %s111 = sadd.s32 %s110, 1
    %p114 = scmp.eq.s32.totalorder %s13, 1
    %p115 = scmp.ne.s32.totalorder %s110, %s112
    %p116 = scmp.eq.s32.totalorder %s13, 0
    %p117 = por %p115, %p116
    %p118 = scmp.ne.s32.totalorder %s110, %s112
    %p119 = scmp.eq.s32.totalorder %s18, 1
    %p120 = por %p118, %p119
    %p121 = scmp.ne.s32.totalorder %s112, %s113
    %p122 = scmp.eq.s32.totalorder %s18, 0
    %p123 = por %p121, %p122
    %p124 = scmp.ne.s32.totalorder %s112, %s113
    %p125 = scmp.eq.s32.totalorder %s19, 1
    %p126 = por %p124, %p125
    %p128 = scmp.ne.s32.totalorder %s113, %s127
    %p129 = scmp.eq.s32.totalorder %s19, 0
    %p130 = por %p128, %p129
    %s132 = sadd.s32 %s131, 1
    %p135 = scmp.eq.s32.totalorder %s13, 1
    %p136 = scmp.ne.s32.totalorder %s131, %s133
    %p137 = scmp.eq.s32.totalorder %s13, 0
    %p138 = por %p136, %p137
    %p139 = scmp.ne.s32.totalorder %s131, %s133
    %p140 = scmp.eq.s32.totalorder %s18, 1
    %p141 = por %p139, %p140
    %p142 = scmp.ne.s32.totalorder %s133, %s134
    %p143 = scmp.eq.s32.totalorder %s18, 0
    %p144 = por %p142, %p143
    %p145 = scmp.ne.s32.totalorder %s133, %s134
    %p146 = scmp.eq.s32.totalorder %s19, 1
    %p147 = por %p145, %p146
    %p149 = scmp.ne.s32.totalorder %s134, %s148
    %p150 = scmp.eq.s32.totalorder %s19, 0
    %p151 = por %p149, %p150
    %s153 = sadd.s32 %s152, 1
    %p156 = scmp.eq.s32.totalorder %s13, 1
    %p157 = scmp.ne.s32.totalorder %s152, %s154
    %p158 = scmp.eq.s32.totalorder %s13, 0
    %p159 = por %p157, %p158
    %p160 = scmp.ne.s32.totalorder %s152, %s154
    %p161 = scmp.eq.s32.totalorder %s18, 1
    %p162 = por %p160, %p161
    %p163 = scmp.ne.s32.totalorder %s154, %s155
    %p164 = scmp.eq.s32.totalorder %s18, 0
    %p165 = por %p163, %p164
    %p166 = scmp.ne.s32.totalorder %s154, %s155
    %p167 = scmp.eq.s32.totalorder %s19, 1
    %p168 = por %p166, %p167
    %p170 = scmp.ne.s32.totalorder %s155, %s169
    %p171 = scmp.eq.s32.totalorder %s19, 0
    %p172 = por %p170, %p171
    %s173 = ssub.s32 %s13, %s20
    %p174 = scmp.eq.s32.totalorder %s173, 0
    %s176 = sadd.s32 %s175, 1
    %s177 = scalar_select %p174, %s175, %s176
    %p180 = pneg %p174
    %p181 = scmp.eq.s32.totalorder %s13, 1
    %p182 = por %p180, %p181
    %p183 = scmp.ne.s32.totalorder %s175, %s178
    %p184 = scmp.eq.s32.totalorder %s13, 0
    %p185 = por %p183, %p184
    %p186 = scmp.ne.s32.totalorder %s175, %s178
    %p187 = scmp.eq.s32.totalorder %s18, 1
    %p188 = por %p186, %p187
    %p189 = scmp.ne.s32.totalorder %s178, %s179
    %p190 = scmp.eq.s32.totalorder %s18, 0
    %p191 = por %p189, %p190
    %p192 = scmp.ne.s32.totalorder %s178, %s179
    %p193 = scmp.eq.s32.totalorder %s19, 1
    %p194 = por %p192, %p193
    %p196 = scmp.ne.s32.totalorder %s179, %s195
    %p197 = scmp.eq.s32.totalorder %s19, 0
    %p198 = por %p196, %p197
    %p199 = scmp.le.s32.totalorder 1, %s13
    %p200 = scmp.lt.s32.totalorder %s13, 3
    %p201 = pnand %p199, %p200
    %p202 = pneg %p201
    // Predicated region
    $region9: #{preact_block_wndrop_forward.1} parent=5 // pred_check
      _
    $region10: #{preact_block_wndrop_forward.1} parent=5 // pred_check_branch
      %204 = sbr.rel (%p201) target = $region12
    $region11: #{preact_block_wndrop_forward.1} parent=5 // pred_region
      %s205 = ssub.s32 %s13, 1
      // Predicated region
      $region13: #{preact_block_wndrop_forward.1} parent=11 // pred_check
        %p206 = pneg %p60
      $region14: #{preact_block_wndrop_forward.1} parent=11 // pred_check_branch
        %208 = sbr.rel (%p206) target = $region16
      $region15: #{preact_block_wndrop_forward.1} parent=11 // pred_region
        _
      $region16: #{preact_block_wndrop_forward.1} parent=11 // pred_fallthru
        _
      // Predicated region
      $region17: #{preact_block_wndrop_forward.1} parent=11 // pred_check
        %p209 = pneg %p81
      $region18: #{preact_block_wndrop_forward.1} parent=11 // pred_check_branch
        %211 = sbr.rel (%p209) target = $region20
      $region19: #{preact_block_wndrop_forward.1} parent=11 // pred_region
        _
      $region20: #{preact_block_wndrop_forward.1} parent=11 // pred_fallthru
        _
      // Predicated region
      $region21: #{preact_block_wndrop_forward.1} parent=11 // pred_check
        %p212 = pneg %p102
      $region22: #{preact_block_wndrop_forward.1} parent=11 // pred_check_branch
        %214 = sbr.rel (%p212) target = $region24
      $region23: #{preact_block_wndrop_forward.1} parent=11 // pred_region
        _
      $region24: #{preact_block_wndrop_forward.1} parent=11 // pred_fallthru
        _
      // Predicated region
      $region25: #{preact_block_wndrop_forward.1} parent=11 // pred_check
        %p215 = pneg %p123
      $region26: #{preact_block_wndrop_forward.1} parent=11 // pred_check_branch
        %217 = sbr.rel (%p215) target = $region28
      $region27: #{preact_block_wndrop_forward.1} parent=11 // pred_region
        _
      $region28: #{preact_block_wndrop_forward.1} parent=11 // pred_fallthru
        _
      // Predicated region
      $region29: #{preact_block_wndrop_forward.1} parent=11 // pred_check
        %p218 = pneg %p144
      $region30: #{preact_block_wndrop_forward.1} parent=11 // pred_check_branch
        %220 = sbr.rel (%p218) target = $region32
      $region31: #{preact_block_wndrop_forward.1} parent=11 // pred_region
        _
      $region32: #{preact_block_wndrop_forward.1} parent=11 // pred_fallthru
        _
      // Predicated region
      $region33: #{preact_block_wndrop_forward.1} parent=11 // pred_check
        %p221 = pneg %p165
      $region34: #{preact_block_wndrop_forward.1} parent=11 // pred_check_branch
        %223 = sbr.rel (%p221) target = $region36
      $region35: #{preact_block_wndrop_forward.1} parent=11 // pred_region
        _
      $region36: #{preact_block_wndrop_forward.1} parent=11 // pred_fallthru
        _
    $region12: #{preact_block_wndrop_forward.1} parent=5 // pred_fallthru
      _
    %p224 = scmp.lt.s32.totalorder %s13, 2
    // Predicated region
    $region37: #{preact_block_wndrop_forward.1} parent=5 // pred_check
      %p225 = pneg %p224
    $region38: #{preact_block_wndrop_forward.1} parent=5 // pred_check_branch
      %227 = sbr.rel (%p225) target = $region40
    $region39: #{preact_block_wndrop_forward.1} parent=5 // pred_region
      // Predicated region
      $region41: #{preact_block_wndrop_forward.1} parent=39 // pred_check
        %p228 = pneg %p33
      $region42: #{preact_block_wndrop_forward.1} parent=39 // pred_check_branch
        %230 = sbr.rel (%p228) target = $region44
      $region43: #{preact_block_wndrop_forward.1} parent=39 // pred_region
        %p231 = scmp.lt.s32.totalorder %s13, 1
        %s232 = scalar_select %p231, %s13, 1
        %s233 = smul.addr %s232, 32
        %s234 = smul.addr %s233, 8
        %s235 = scalar_lea.vmem %s0, %s234
      $region44: #{preact_block_wndrop_forward.1} parent=39 // pred_fallthru
        _
    $region40: #{preact_block_wndrop_forward.1} parent=5 // pred_fallthru
      _
    %p236 = scmp.le.s32.totalorder 1, %s13
    %p237 = scmp.lt.s32.totalorder %s13, 3
    %p238 = pnand %p236, %p237
    %p239 = pneg %p238
    // Predicated region
    $region45: #{preact_block_wndrop_forward.1} parent=5 // pred_check
      _
    $region46: #{preact_block_wndrop_forward.1} parent=5 // pred_check_branch
      %241 = sbr.rel (%p238) target = $region48
    $region47: #{preact_block_wndrop_forward.1} parent=5 // pred_region
      %s242 = ssub.s32 %s13, 1
      %p243 = scmp.lt.s32.totalorder %s18, 1
      %s244 = scalar_select %p243, %s18, 1
      %s245 = smul.addr %s244, 32
      %s246 = smul.addr %s245, 8
      %s247 = scalar_lea.vmem %s0, %s246
      %p248 = pneg %p39
      %p249 = pneg %p36
      %p250 = pneg %p60
      %p251 = pneg %p57
      %p252 = pneg %p81
      %p253 = pneg %p78
      %p254 = pneg %p102
      %p255 = pneg %p99
      %p256 = pneg %p123
      %p257 = pneg %p120
      %p258 = pneg %p144
      %p259 = pneg %p141
      %p260 = pneg %p165
      %p261 = pneg %p162
      %p262 = pneg %p191
      %p263 = pneg %p188
      %p264 = scmp.lt.s32.totalorder %s18, 1
      %s265 = scalar_select %p264, %s18, 1
      %s266 = smul.addr %s265, 8
      %s267 = smul.addr %s266, 8
      %s268 = scalar_lea.vmem %s7, %s267
      %p269 = scmp.lt.s32.totalorder %s18, 1
      %s270 = scalar_select %p269, %s18, 1
      %s271 = smul.addr %s270, 32
      %s272 = smul.addr %s271, 8
      %s273 = scalar_lea.vmem %s0, %s272
      %p274 = scmp.lt.s32.totalorder %s18, 1
      %s275 = scalar_select %p274, %s18, 1
      %s276 = smul.addr %s275, 8
      %s277 = smul.addr %s276, 8
      %s278 = scalar_lea.vmem %s7, %s277
      %vm280 = vcmask 31744
      %281 = vst.msk [vmem:[#allocation2] sm:$0xff] %vm280, 0.0
      %282 = vst.msk [vmem:[#allocation2 + $0x8] sm:$0xff] %vm280, 0.0
      %vm283 = vcmask 25600
      %284 = vst.msk [vmem:[#allocation2 + $0x10] sm:$0x3] %vm283, 0.0
      %s285 = scalar_lea.vmem [#allocation2], 408
      %286 = vst.msk [vmem:[%s285] sm:$0xff] %vm280, 0.0
      %287 = vst.msk [vmem:[%s285 + $0x8] sm:$0xff] %vm280, 0.0
      %288 = vst.msk [vmem:[%s285 + $0x10] sm:$0x3] %vm283, 0.0
      %vm289 = vcmask 24576
      %290 = vst.msk [vmem:[#allocation2] sm:$0x1] %vm289, 0.0
      %291 = vst.msk [vmem:[#allocation2 + $0x18] sm:$0x1] %vm289, 0.0
      %292 = vst.msk [vmem:[#allocation2 + $0x30] sm:$0x1] %vm289, 0.0
      %293 = vst.msk [vmem:[#allocation2 + $0x48] sm:$0x1] %vm289, 0.0
      %294 = vst.msk [vmem:[#allocation2 + $0x60] sm:$0x1] %vm289, 0.0
      %295 = vst.msk [vmem:[#allocation2 + $0x78] sm:$0x1] %vm289, 0.0
      %296 = vst.msk [vmem:[#allocation2 + $0x90] sm:$0x1] %vm289, 0.0
      %297 = vst.msk [vmem:[#allocation2 + $0xa8] sm:$0x1] %vm289, 0.0
      %298 = vst.msk [vmem:[#allocation2 + $0xc0] sm:$0x1] %vm289, 0.0
      %299 = vst.msk [vmem:[#allocation2 + $0xd8] sm:$0x1] %vm289, 0.0
      %300 = vst.msk [vmem:[#allocation2 + $0xf0] sm:$0x1] %vm289, 0.0
      %301 = vst.msk [vmem:[#allocation2 + $0x108] sm:$0x1] %vm289, 0.0
      %302 = vst.msk [vmem:[#allocation2 + $0x120] sm:$0x1] %vm289, 0.0
      %303 = vst.msk [vmem:[#allocation2 + $0x138] sm:$0x1] %vm289, 0.0
      %304 = vst.msk [vmem:[#allocation2 + $0x150] sm:$0x1] %vm289, 0.0
      %305 = vst.msk [vmem:[#allocation2 + $0x168] sm:$0x1] %vm289, 0.0
      %306 = vst.msk [vmem:[#allocation2 + $0x180] sm:$0x1] %vm289, 0.0
      %307 = vst.msk [vmem:[#allocation2 + $0x198] sm:$0x1] %vm289, 0.0
      %308 = vst.msk [vmem:[#allocation2 + $0x11] sm:$0x1] %vm289, 0.0
      %309 = vst.msk [vmem:[#allocation2 + $0x29] sm:$0x1] %vm289, 0.0
      %310 = vst.msk [vmem:[#allocation2 + $0x41] sm:$0x1] %vm289, 0.0
      %311 = vst.msk [vmem:[#allocation2 + $0x59] sm:$0x1] %vm289, 0.0
      %312 = vst.msk [vmem:[#allocation2 + $0x71] sm:$0x1] %vm289, 0.0
      %313 = vst.msk [vmem:[#allocation2 + $0x89] sm:$0x1] %vm289, 0.0
      %314 = vst.msk [vmem:[#allocation2 + $0xa1] sm:$0x1] %vm289, 0.0
      %315 = vst.msk [vmem:[#allocation2 + $0xb9] sm:$0x1] %vm289, 0.0
      %316 = vst.msk [vmem:[#allocation2 + $0xd1] sm:$0x1] %vm289, 0.0
      %317 = vst.msk [vmem:[#allocation2 + $0xe9] sm:$0x1] %vm289, 0.0
      %318 = vst.msk [vmem:[#allocation2 + $0x101] sm:$0x1] %vm289, 0.0
      %319 = vst.msk [vmem:[#allocation2 + $0x119] sm:$0x1] %vm289, 0.0
      %320 = vst.msk [vmem:[#allocation2 + $0x131] sm:$0x1] %vm289, 0.0
      %321 = vst.msk [vmem:[#allocation2 + $0x149] sm:$0x1] %vm289, 0.0
      %322 = vst.msk [vmem:[#allocation2 + $0x161] sm:$0x1] %vm289, 0.0
      %323 = vst.msk [vmem:[#allocation2 + $0x179] sm:$0x1] %vm289, 0.0
      %324 = vst.msk [vmem:[#allocation2 + $0x191] sm:$0x1] %vm289, 0.0
      %325 = vst.msk [vmem:[#allocation2 + $0x1a9] sm:$0x1] %vm289, 0.0
      %v326 = vld [vmem:[%s273] sm:$0xff]
      %v327 = vld [vmem:[%s273 + $0x8] sm:$0xff]
      %v328 = vld [vmem:[%s273 + $0x10] sm:$0xff]
      %v329 = vld [vmem:[%s273 + $0x18] sm:$0xff]
      %v330 = vld [vmem:[%s273 + $0x20] sm:$0xff]
      %v331 = vld [vmem:[%s273 + $0x28] sm:$0xff]
      %v332 = vld [vmem:[%s273 + $0x30] sm:$0xff]
      %v333 = vld [vmem:[%s273 + $0x38] sm:$0xff]
      %v334 = vld [vmem:[%s273 + $0x40] sm:$0xff]
      %v335 = vld [vmem:[%s273 + $0x48] sm:$0xff]
      %v336 = vld [vmem:[%s273 + $0x50] sm:$0xff]
      %v337 = vld [vmem:[%s273 + $0x58] sm:$0xff]
      %v338 = vld [vmem:[%s273 + $0x60] sm:$0xff]
      %v339 = vld [vmem:[%s273 + $0x68] sm:$0xff]
      %v340 = vld [vmem:[%s273 + $0x70] sm:$0xff]
      %v341 = vld [vmem:[%s273 + $0x78] sm:$0xff]
      %v342 = vld [vmem:[%s273 + $0x80] sm:$0xff]
      %v343 = vld [vmem:[%s273 + $0x88] sm:$0xff]
      %v344 = vld [vmem:[%s273 + $0x90] sm:$0xff]
      %v345 = vld [vmem:[%s273 + $0x98] sm:$0xff]
      %v346 = vld [vmem:[%s273 + $0xa0] sm:$0xff]
      %v347 = vld [vmem:[%s273 + $0xa8] sm:$0xff]
      %v348 = vld [vmem:[%s273 + $0xb0] sm:$0xff]
      %v349 = vld [vmem:[%s273 + $0xb8] sm:$0xff]
      %v350 = vld [vmem:[%s273 + $0xc0] sm:$0xff]
      %v351 = vld [vmem:[%s273 + $0xc8] sm:$0xff]
      %v352 = vld [vmem:[%s273 + $0xd0] sm:$0xff]
      %v353 = vld [vmem:[%s273 + $0xd8] sm:$0xff]
      %v354 = vld [vmem:[%s273 + $0xe0] sm:$0xff]
      %v355 = vld [vmem:[%s273 + $0xe8] sm:$0xff]
      %v356 = vld [vmem:[%s273 + $0xf0] sm:$0xff]
      %v357 = vld [vmem:[%s273 + $0xf8] sm:$0xff]
      %v358 = vld [vmem:[%s1] sm:$0x1]
      %v360 = vperm.slane %v358, 0
      %v362 = vmul.f32 %v326, %v360
      %v363 = vmul.f32 %v327, %v360
      %v364 = vmul.f32 %v328, %v360
      %v365 = vmul.f32 %v329, %v360
      %v366 = vmul.f32 %v330, %v360
      %v367 = vmul.f32 %v331, %v360
      %v368 = vmul.f32 %v332, %v360
      %v369 = vmul.f32 %v333, %v360
      %v370 = vmul.f32 %v334, %v360
      %v371 = vmul.f32 %v335, %v360
      %v372 = vmul.f32 %v336, %v360
      %v373 = vmul.f32 %v337, %v360
      %v374 = vmul.f32 %v338, %v360
      %v375 = vmul.f32 %v339, %v360
      %v376 = vmul.f32 %v340, %v360
      %v377 = vmul.f32 %v341, %v360
      %v378 = vmul.f32 %v342, %v360
      %v379 = vmul.f32 %v343, %v360
      %v380 = vmul.f32 %v344, %v360
      %v381 = vmul.f32 %v345, %v360
      %v382 = vmul.f32 %v346, %v360
      %v383 = vmul.f32 %v347, %v360
      %v384 = vmul.f32 %v348, %v360
      %v385 = vmul.f32 %v349, %v360
      %v386 = vmul.f32 %v350, %v360
      %v387 = vmul.f32 %v351, %v360
      %v388 = vmul.f32 %v352, %v360
      %v389 = vmul.f32 %v353, %v360
      %v390 = vmul.f32 %v354, %v360
      %v391 = vmul.f32 %v355, %v360
      %v392 = vmul.f32 %v356, %v360
      %v393 = vmul.f32 %v357, %v360
      %v394 = vld [vmem:[%s2] sm:$0x1]
      %v396 = vperm.slane %v394, 0
      %v398 = vadd.f32 %v362, %v396
      %v399 = vadd.f32 %v363, %v396
      %v400 = vadd.f32 %v364, %v396
      %v401 = vadd.f32 %v365, %v396
      %v402 = vadd.f32 %v366, %v396
      %v403 = vadd.f32 %v367, %v396
      %v404 = vadd.f32 %v368, %v396
      %v405 = vadd.f32 %v369, %v396
      %v406 = vadd.f32 %v370, %v396
      %v407 = vadd.f32 %v371, %v396
      %v408 = vadd.f32 %v372, %v396
      %v409 = vadd.f32 %v373, %v396
      %v410 = vadd.f32 %v374, %v396
      %v411 = vadd.f32 %v375, %v396
      %v412 = vadd.f32 %v376, %v396
      %v413 = vadd.f32 %v377, %v396
      %v414 = vadd.f32 %v378, %v396
      %v415 = vadd.f32 %v379, %v396
      %v416 = vadd.f32 %v380, %v396
      %v417 = vadd.f32 %v381, %v396
      %v418 = vadd.f32 %v382, %v396
      %v419 = vadd.f32 %v383, %v396
      %v420 = vadd.f32 %v384, %v396
      %v421 = vadd.f32 %v385, %v396
      %v422 = vadd.f32 %v386, %v396
      %v423 = vadd.f32 %v387, %v396
      %v424 = vadd.f32 %v388, %v396
      %v425 = vadd.f32 %v389, %v396
      %v426 = vadd.f32 %v390, %v396
      %v427 = vadd.f32 %v391, %v396
      %v428 = vadd.f32 %v392, %v396
      %v429 = vadd.f32 %v393, %v396
      %v430 = vmax.f32 %v398, 0.0
      %v431 = vmax.f32 %v399, 0.0
      %v432 = vmax.f32 %v400, 0.0
      %v433 = vmax.f32 %v401, 0.0
      %v434 = vmax.f32 %v402, 0.0
      %v435 = vmax.f32 %v403, 0.0
      %v436 = vmax.f32 %v404, 0.0
      %v437 = vmax.f32 %v405, 0.0
      %v438 = vmax.f32 %v406, 0.0
      %v439 = vmax.f32 %v407, 0.0
      %v440 = vmax.f32 %v408, 0.0
      %v441 = vmax.f32 %v409, 0.0
      %v442 = vmax.f32 %v410, 0.0
      %v443 = vmax.f32 %v411, 0.0
      %v444 = vmax.f32 %v412, 0.0
      %v445 = vmax.f32 %v413, 0.0
      %v446 = vmax.f32 %v414, 0.0
      %v447 = vmax.f32 %v415, 0.0
      %v448 = vmax.f32 %v416, 0.0
      %v449 = vmax.f32 %v417, 0.0
      %v450 = vmax.f32 %v418, 0.0
      %v451 = vmax.f32 %v419, 0.0
      %v452 = vmax.f32 %v420, 0.0
      %v453 = vmax.f32 %v421, 0.0
      %v454 = vmax.f32 %v422, 0.0
      %v455 = vmax.f32 %v423, 0.0
      %v456 = vmax.f32 %v424, 0.0
      %v457 = vmax.f32 %v425, 0.0
      %v458 = vmax.f32 %v426, 0.0
      %v459 = vmax.f32 %v427, 0.0
      %v460 = vmax.f32 %v428, 0.0
      %v461 = vmax.f32 %v429, 0.0
      %s462 = scalar_lea.vmem [#allocation2], 24
      %463 = vst.msk [vmem:[%s462 + $0x1] sm:$0xff] %vm280, %v430
      %464 = vst.msk [vmem:[%s462 + $0x9] sm:$0xff] %vm280, %v431
      %465 = vst.msk [vmem:[%s462 + $0x19] sm:$0xff] %vm280, %v432
      %466 = vst.msk [vmem:[%s462 + $0x21] sm:$0xff] %vm280, %v433
      %467 = vst.msk [vmem:[%s462 + $0x31] sm:$0xff] %vm280, %v434
      %468 = vst.msk [vmem:[%s462 + $0x39] sm:$0xff] %vm280, %v435
      %469 = vst.msk [vmem:[%s462 + $0x49] sm:$0xff] %vm280, %v436
      %470 = vst.msk [vmem:[%s462 + $0x51] sm:$0xff] %vm280, %v437
      %471 = vst.msk [vmem:[%s462 + $0x61] sm:$0xff] %vm280, %v438
      %472 = vst.msk [vmem:[%s462 + $0x69] sm:$0xff] %vm280, %v439
      %473 = vst.msk [vmem:[%s462 + $0x79] sm:$0xff] %vm280, %v440
      %474 = vst.msk [vmem:[%s462 + $0x81] sm:$0xff] %vm280, %v441
      %475 = vst.msk [vmem:[%s462 + $0x91] sm:$0xff] %vm280, %v442
      %476 = vst.msk [vmem:[%s462 + $0x99] sm:$0xff] %vm280, %v443
      %477 = vst.msk [vmem:[%s462 + $0xa9] sm:$0xff] %vm280, %v444
      %478 = vst.msk [vmem:[%s462 + $0xb1] sm:$0xff] %vm280, %v445
      %479 = vst.msk [vmem:[%s462 + $0xc1] sm:$0xff] %vm280, %v446
      %480 = vst.msk [vmem:[%s462 + $0xc9] sm:$0xff] %vm280, %v447
      %481 = vst.msk [vmem:[%s462 + $0xd9] sm:$0xff] %vm280, %v448
      %482 = vst.msk [vmem:[%s462 + $0xe1] sm:$0xff] %vm280, %v449
      %483 = vst.msk [vmem:[%s462 + $0xf1] sm:$0xff] %vm280, %v450
      %484 = vst.msk [vmem:[%s462 + $0xf9] sm:$0xff] %vm280, %v451
      %485 = vst.msk [vmem:[%s462 + $0x109] sm:$0xff] %vm280, %v452
      %486 = vst.msk [vmem:[%s462 + $0x111] sm:$0xff] %vm280, %v453
      %487 = vst.msk [vmem:[%s462 + $0x121] sm:$0xff] %vm280, %v454
      %488 = vst.msk [vmem:[%s462 + $0x129] sm:$0xff] %vm280, %v455
      %489 = vst.msk [vmem:[%s462 + $0x139] sm:$0xff] %vm280, %v456
      %490 = vst.msk [vmem:[%s462 + $0x141] sm:$0xff] %vm280, %v457
      %491 = vst.msk [vmem:[%s462 + $0x151] sm:$0xff] %vm280, %v458
      %492 = vst.msk [vmem:[%s462 + $0x159] sm:$0xff] %vm280, %v459
      %493 = vst.msk [vmem:[%s462 + $0x169] sm:$0xff] %vm280, %v460
      %494 = vst.msk [vmem:[%s462 + $0x171] sm:$0xff] %vm280, %v461
      %v495 = vld [vmem:[#allocation2] ss:$2 sm:$0xff]
      %s496 = scalar_lea.vmem [#allocation2], 48
      %v497 = vld [vmem:[%s496] ss:$2 sm:$0xff]
      %s498 = scalar_lea.vmem [#allocation2], 96
      %v499 = vld [vmem:[%s498] ss:$2 sm:$0xff]
      %s500 = scalar_lea.vmem [#allocation2], 144
      %v501 = vld [vmem:[%s500] ss:$2 sm:$0xff]
      %s502 = scalar_lea.vmem [#allocation2], 192
      %v503 = vld [vmem:[%s502] ss:$2 sm:$0xff]
      %s504 = scalar_lea.vmem [#allocation2], 240
      %v505 = vld [vmem:[%s504] ss:$2 sm:$0xff]
      %s506 = scalar_lea.vmem [#allocation2], 288
      %v507 = vld [vmem:[%s506] ss:$2 sm:$0xff]
      %s508 = scalar_lea.vmem [#allocation2], 336
      %v509 = vld [vmem:[%s508] ss:$2 sm:$0xff]
      %510 = vst.msk [vmem:[#allocation3] sm:$0xff] %vm280, %v495
      %511 = vst.msk [vmem:[#allocation3 + $0x8] sm:$0xff] %vm280, %v497
      %512 = vst.msk [vmem:[#allocation3 + $0x10] sm:$0xff] %vm280, %v499
      %513 = vst.msk [vmem:[#allocation3 + $0x18] sm:$0xff] %vm280, %v501
      %514 = vst.msk [vmem:[#allocation3 + $0x20] sm:$0xff] %vm280, %v503
      %515 = vst.msk [vmem:[#allocation3 + $0x28] sm:$0xff] %vm280, %v505
      %516 = vst.msk [vmem:[#allocation3 + $0x30] sm:$0xff] %vm280, %v507
      %517 = vst.msk [vmem:[#allocation3 + $0x38] sm:$0xff] %vm280, %v509
      %s518 = scalar_lea.vmem [#allocation2], 1
      %v519 = vld [vmem:[%s518] ss:$2 sm:$0xff]
      %s520 = scalar_lea.vmem [#allocation2], 49
      %v521 = vld [vmem:[%s520] ss:$2 sm:$0xff]
      %s522 = scalar_lea.vmem [#allocation2], 97
      %v523 = vld [vmem:[%s522] ss:$2 sm:$0xff]
      %s524 = scalar_lea.vmem [#allocation2], 145
      %v525 = vld [vmem:[%s524] ss:$2 sm:$0xff]
      %s526 = scalar_lea.vmem [#allocation2], 193
      %v527 = vld [vmem:[%s526] ss:$2 sm:$0xff]
      %s528 = scalar_lea.vmem [#allocation2], 241
      %v529 = vld [vmem:[%s528] ss:$2 sm:$0xff]
      %s530 = scalar_lea.vmem [#allocation2], 289
      %v531 = vld [vmem:[%s530] ss:$2 sm:$0xff]
      %s532 = scalar_lea.vmem [#allocation2], 337
      %v533 = vld [vmem:[%s532] ss:$2 sm:$0xff]
      %542 = vrot.lane.b32.xlu0 %v519, 4
      %v543 = vpop.permute.xlu0 %542
      %544 = vrot.lane.b32.xlu0 %v521, 4
      %v545 = vpop.permute.xlu0 %544
      %546 = vrot.lane.b32.xlu0 %v523, 4
      %v547 = vpop.permute.xlu0 %546
      %548 = vrot.lane.b32.xlu0 %v525, 4
      %v549 = vpop.permute.xlu0 %548
      %550 = vrot.lane.b32.xlu0 %v527, 4
      %v551 = vpop.permute.xlu0 %550
      %552 = vrot.lane.b32.xlu0 %v529, 4
      %v553 = vpop.permute.xlu0 %552
      %554 = vrot.lane.b32.xlu0 %v531, 4
      %v555 = vpop.permute.xlu0 %554
      %556 = vrot.lane.b32.xlu0 %v533, 4
      %v557 = vpop.permute.xlu0 %556
      %vm566 = vcmask 64544
      %567 = vst.msk [vmem:[#allocation3] sm:$0xff] %vm566, %v543
      %568 = vst.msk [vmem:[#allocation3 + $0x8] sm:$0xff] %vm566, %v545
      %569 = vst.msk [vmem:[#allocation3 + $0x10] sm:$0xff] %vm566, %v547
      %570 = vst.msk [vmem:[#allocation3 + $0x18] sm:$0xff] %vm566, %v549
      %571 = vst.msk [vmem:[#allocation3 + $0x20] sm:$0xff] %vm566, %v551
      %572 = vst.msk [vmem:[#allocation3 + $0x28] sm:$0xff] %vm566, %v553
      %573 = vst.msk [vmem:[#allocation3 + $0x30] sm:$0xff] %vm566, %v555
      %574 = vst.msk [vmem:[#allocation3 + $0x38] sm:$0xff] %vm566, %v557
      %s575 = scalar_lea.vmem [#allocation2], 2
      %v576 = vld [vmem:[%s575] ss:$2 sm:$0xff]
      %s577 = scalar_lea.vmem [#allocation2], 50
      %v578 = vld [vmem:[%s577] ss:$2 sm:$0xff]
      %s579 = scalar_lea.vmem [#allocation2], 98
      %v580 = vld [vmem:[%s579] ss:$2 sm:$0xff]
      %s581 = scalar_lea.vmem [#allocation2], 146
      %v582 = vld [vmem:[%s581] ss:$2 sm:$0xff]
      %s583 = scalar_lea.vmem [#allocation2], 194
      %v584 = vld [vmem:[%s583] ss:$2 sm:$0xff]
      %s585 = scalar_lea.vmem [#allocation2], 242
      %v586 = vld [vmem:[%s585] ss:$2 sm:$0xff]
      %s587 = scalar_lea.vmem [#allocation2], 290
      %v588 = vld [vmem:[%s587] ss:$2 sm:$0xff]
      %s589 = scalar_lea.vmem [#allocation2], 338
      %v590 = vld [vmem:[%s589] ss:$2 sm:$0xff]
      %599 = vrot.lane.b32.xlu0 %v576, 8
      %v600 = vpop.permute.xlu0 %599
      %601 = vrot.lane.b32.xlu0 %v578, 8
      %v602 = vpop.permute.xlu0 %601
      %603 = vrot.lane.b32.xlu0 %v580, 8
      %v604 = vpop.permute.xlu0 %603
      %605 = vrot.lane.b32.xlu0 %v582, 8
      %v606 = vpop.permute.xlu0 %605
      %607 = vrot.lane.b32.xlu0 %v584, 8
      %v608 = vpop.permute.xlu0 %607
      %609 = vrot.lane.b32.xlu0 %v586, 8
      %v610 = vpop.permute.xlu0 %609
      %611 = vrot.lane.b32.xlu0 %v588, 8
      %v612 = vpop.permute.xlu0 %611
      %613 = vrot.lane.b32.xlu0 %v590, 8
      %v614 = vpop.permute.xlu0 %613
      %vm623 = vcmask 97344
      %624 = vst.msk [vmem:[#allocation3] sm:$0xff] %vm623, %v600
      %625 = vst.msk [vmem:[#allocation3 + $0x8] sm:$0xff] %vm623, %v602
      %626 = vst.msk [vmem:[#allocation3 + $0x10] sm:$0xff] %vm623, %v604
      %627 = vst.msk [vmem:[#allocation3 + $0x18] sm:$0xff] %vm623, %v606
      %628 = vst.msk [vmem:[#allocation3 + $0x20] sm:$0xff] %vm623, %v608
      %629 = vst.msk [vmem:[#allocation3 + $0x28] sm:$0xff] %vm623, %v610
      %630 = vst.msk [vmem:[#allocation3 + $0x30] sm:$0xff] %vm623, %v612
      %631 = vst.msk [vmem:[#allocation3 + $0x38] sm:$0xff] %vm623, %v614
      %v632 = vld [vmem:[%s462] ss:$2 sm:$0xff]
      %s633 = scalar_lea.vmem %s462, 48 [#allocation2]
      %v634 = vld [vmem:[%s633] ss:$2 sm:$0xff]
      %s635 = scalar_lea.vmem %s462, 96 [#allocation2]
      %v636 = vld [vmem:[%s635] ss:$2 sm:$0xff]
      %s637 = scalar_lea.vmem %s462, 144 [#allocation2]
      %v638 = vld [vmem:[%s637] ss:$2 sm:$0xff]
      %s639 = scalar_lea.vmem %s462, 192 [#allocation2]
      %v640 = vld [vmem:[%s639] ss:$2 sm:$0xff]
      %s641 = scalar_lea.vmem %s462, 240 [#allocation2]
      %v642 = vld [vmem:[%s641] ss:$2 sm:$0xff]
      %s643 = scalar_lea.vmem %s462, 288 [#allocation2]
      %v644 = vld [vmem:[%s643] ss:$2 sm:$0xff]
      %s645 = scalar_lea.vmem %s462, 336 [#allocation2]
      %v646 = vld [vmem:[%s645] ss:$2 sm:$0xff]
      %655 = vrot.lane.b32.xlu0 %v632, 12
      %v656 = vpop.permute.xlu0 %655
      %657 = vrot.lane.b32.xlu0 %v634, 12
      %v658 = vpop.permute.xlu0 %657
      %659 = vrot.lane.b32.xlu0 %v636, 12
      %v660 = vpop.permute.xlu0 %659
      %661 = vrot.lane.b32.xlu0 %v638, 12
      %v662 = vpop.permute.xlu0 %661
      %663 = vrot.lane.b32.xlu0 %v640, 12
      %v664 = vpop.permute.xlu0 %663
      %665 = vrot.lane.b32.xlu0 %v642, 12
      %v666 = vpop.permute.xlu0 %665
      %667 = vrot.lane.b32.xlu0 %v644, 12
      %v668 = vpop.permute.xlu0 %667
      %669 = vrot.lane.b32.xlu0 %v646, 12
      %v670 = vpop.permute.xlu0 %669
      %vm679 = vcmask 130144
      %680 = vst.msk [vmem:[#allocation3] sm:$0xff] %vm679, %v656
      %681 = vst.msk [vmem:[#allocation3 + $0x8] sm:$0xff] %vm679, %v658
      %682 = vst.msk [vmem:[#allocation3 + $0x10] sm:$0xff] %vm679, %v660
      %683 = vst.msk [vmem:[#allocation3 + $0x18] sm:$0xff] %vm679, %v662
      %684 = vst.msk [vmem:[#allocation3 + $0x20] sm:$0xff] %vm679, %v664
      %685 = vst.msk [vmem:[#allocation3 + $0x28] sm:$0xff] %vm679, %v666
      %686 = vst.msk [vmem:[#allocation3 + $0x30] sm:$0xff] %vm679, %v668
      %687 = vst.msk [vmem:[#allocation3 + $0x38] sm:$0xff] %vm679, %v670
      %s688 = scalar_lea.vmem %s462, 1 [#allocation2]
      %v689 = vld [vmem:[%s688] ss:$2 sm:$0xff]
      %s690 = scalar_lea.vmem %s462, 49 [#allocation2]
      %v691 = vld [vmem:[%s690] ss:$2 sm:$0xff]
      %s692 = scalar_lea.vmem %s462, 97 [#allocation2]
      %v693 = vld [vmem:[%s692] ss:$2 sm:$0xff]
      %s694 = scalar_lea.vmem %s462, 145 [#allocation2]
      %v695 = vld [vmem:[%s694] ss:$2 sm:$0xff]
      %s696 = scalar_lea.vmem %s462, 193 [#allocation2]
      %v697 = vld [vmem:[%s696] ss:$2 sm:$0xff]
      %s698 = scalar_lea.vmem %s462, 241 [#allocation2]
      %v699 = vld [vmem:[%s698] ss:$2 sm:$0xff]
      %s700 = scalar_lea.vmem %s462, 289 [#allocation2]
      %v701 = vld [vmem:[%s700] ss:$2 sm:$0xff]
      %s702 = scalar_lea.vmem %s462, 337 [#allocation2]
      %v703 = vld [vmem:[%s702] ss:$2 sm:$0xff]
      %712 = vrot.lane.b32.xlu0 %v689, 16
      %v713 = vpop.permute.xlu0 %712
      %714 = vrot.lane.b32.xlu0 %v691, 16
      %v715 = vpop.permute.xlu0 %714
      %716 = vrot.lane.b32.xlu0 %v693, 16
      %v717 = vpop.permute.xlu0 %716
      %718 = vrot.lane.b32.xlu0 %v695, 16
      %v719 = vpop.permute.xlu0 %718
      %720 = vrot.lane.b32.xlu0 %v697, 16
      %v721 = vpop.permute.xlu0 %720
      %722 = vrot.lane.b32.xlu0 %v699, 16
      %v723 = vpop.permute.xlu0 %722
      %724 = vrot.lane.b32.xlu0 %v701, 16
      %v725 = vpop.permute.xlu0 %724
      %726 = vrot.lane.b32.xlu0 %v703, 16
      %v727 = vpop.permute.xlu0 %726
      %vm736 = vcmask 162944
      %737 = vst.msk [vmem:[#allocation3] sm:$0xff] %vm736, %v713
      %738 = vst.msk [vmem:[#allocation3 + $0x8] sm:$0xff] %vm736, %v715
      %739 = vst.msk [vmem:[#allocation3 + $0x10] sm:$0xff] %vm736, %v717
      %740 = vst.msk [vmem:[#allocation3 + $0x18] sm:$0xff] %vm736, %v719
      %741 = vst.msk [vmem:[#allocation3 + $0x20] sm:$0xff] %vm736, %v721
      %742 = vst.msk [vmem:[#allocation3 + $0x28] sm:$0xff] %vm736, %v723
      %743 = vst.msk [vmem:[#allocation3 + $0x30] sm:$0xff] %vm736, %v725
      %744 = vst.msk [vmem:[#allocation3 + $0x38] sm:$0xff] %vm736, %v727
      %s745 = scalar_lea.vmem %s462, 2 [#allocation2]
      %v746 = vld [vmem:[%s745] ss:$2 sm:$0xff]
      %s747 = scalar_lea.vmem %s462, 50 [#allocation2]
      %v748 = vld [vmem:[%s747] ss:$2 sm:$0xff]
      %s749 = scalar_lea.vmem %s462, 98 [#allocation2]
      %v750 = vld [vmem:[%s749] ss:$2 sm:$0xff]
      %s751 = scalar_lea.vmem %s462, 146 [#allocation2]
      %v752 = vld [vmem:[%s751] ss:$2 sm:$0xff]
      %s753 = scalar_lea.vmem %s462, 194 [#allocation2]
      %v754 = vld [vmem:[%s753] ss:$2 sm:$0xff]
      %s755 = scalar_lea.vmem %s462, 242 [#allocation2]
      %v756 = vld [vmem:[%s755] ss:$2 sm:$0xff]
      %s757 = scalar_lea.vmem %s462, 290 [#allocation2]
      %v758 = vld [vmem:[%s757] ss:$2 sm:$0xff]
      %s759 = scalar_lea.vmem %s462, 338 [#allocation2]
      %v760 = vld [vmem:[%s759] ss:$2 sm:$0xff]
      %769 = vrot.lane.b32.xlu0 %v746, 20
      %v770 = vpop.permute.xlu0 %769
      %771 = vrot.lane.b32.xlu0 %v748, 20
      %v772 = vpop.permute.xlu0 %771
      %773 = vrot.lane.b32.xlu0 %v750, 20
      %v774 = vpop.permute.xlu0 %773
      %775 = vrot.lane.b32.xlu0 %v752, 20
      %v776 = vpop.permute.xlu0 %775
      %777 = vrot.lane.b32.xlu0 %v754, 20
      %v778 = vpop.permute.xlu0 %777
      %779 = vrot.lane.b32.xlu0 %v756, 20
      %v780 = vpop.permute.xlu0 %779
      %781 = vrot.lane.b32.xlu0 %v758, 20
      %v782 = vpop.permute.xlu0 %781
      %783 = vrot.lane.b32.xlu0 %v760, 20
      %v784 = vpop.permute.xlu0 %783
      %vm793 = vcmask 195744
      %794 = vst.msk [vmem:[#allocation3] sm:$0xff] %vm793, %v770
      %795 = vst.msk [vmem:[#allocation3 + $0x8] sm:$0xff] %vm793, %v772
      %796 = vst.msk [vmem:[#allocation3 + $0x10] sm:$0xff] %vm793, %v774
      %797 = vst.msk [vmem:[#allocation3 + $0x18] sm:$0xff] %vm793, %v776
      %798 = vst.msk [vmem:[#allocation3 + $0x20] sm:$0xff] %vm793, %v778
      %799 = vst.msk [vmem:[#allocation3 + $0x28] sm:$0xff] %vm793, %v780
      %800 = vst.msk [vmem:[#allocation3 + $0x30] sm:$0xff] %vm793, %v782
      %801 = vst.msk [vmem:[#allocation3 + $0x38] sm:$0xff] %vm793, %v784
      %s802 = scalar_lea.vmem [#allocation2], 48
      %v803 = vld [vmem:[%s802] ss:$2 sm:$0xff]
      %s804 = scalar_lea.vmem %s802, 48 [#allocation2]
      %v805 = vld [vmem:[%s804] ss:$2 sm:$0xff]
      %s806 = scalar_lea.vmem %s802, 96 [#allocation2]
      %v807 = vld [vmem:[%s806] ss:$2 sm:$0xff]
      %s808 = scalar_lea.vmem %s802, 144 [#allocation2]
      %v809 = vld [vmem:[%s808] ss:$2 sm:$0xff]
      %s810 = scalar_lea.vmem %s802, 192 [#allocation2]
      %v811 = vld [vmem:[%s810] ss:$2 sm:$0xff]
      %s812 = scalar_lea.vmem %s802, 240 [#allocation2]
      %v813 = vld [vmem:[%s812] ss:$2 sm:$0xff]
      %s814 = scalar_lea.vmem %s802, 288 [#allocation2]
      %v815 = vld [vmem:[%s814] ss:$2 sm:$0xff]
      %s816 = scalar_lea.vmem %s802, 336 [#allocation2]
      %v817 = vld [vmem:[%s816] ss:$2 sm:$0xff]
      %826 = vrot.lane.b32.xlu0 %v803, 24
      %v827 = vpop.permute.xlu0 %826
      %828 = vrot.lane.b32.xlu0 %v805, 24
      %v829 = vpop.permute.xlu0 %828
      %830 = vrot.lane.b32.xlu0 %v807, 24
      %v831 = vpop.permute.xlu0 %830
      %832 = vrot.lane.b32.xlu0 %v809, 24
      %v833 = vpop.permute.xlu0 %832
      %834 = vrot.lane.b32.xlu0 %v811, 24
      %v835 = vpop.permute.xlu0 %834
      %836 = vrot.lane.b32.xlu0 %v813, 24
      %v837 = vpop.permute.xlu0 %836
      %838 = vrot.lane.b32.xlu0 %v815, 24
      %v839 = vpop.permute.xlu0 %838
      %840 = vrot.lane.b32.xlu0 %v817, 24
      %v841 = vpop.permute.xlu0 %840
      %vm850 = vcmask 228544
      %851 = vst.msk [vmem:[#allocation3] sm:$0xff] %vm850, %v827
      %852 = vst.msk [vmem:[#allocation3 + $0x8] sm:$0xff] %vm850, %v829
      %853 = vst.msk [vmem:[#allocation3 + $0x10] sm:$0xff] %vm850, %v831
      %854 = vst.msk [vmem:[#allocation3 + $0x18] sm:$0xff] %vm850, %v833
      %855 = vst.msk [vmem:[#allocation3 + $0x20] sm:$0xff] %vm850, %v835
      %856 = vst.msk [vmem:[#allocation3 + $0x28] sm:$0xff] %vm850, %v837
      %857 = vst.msk [vmem:[#allocation3 + $0x30] sm:$0xff] %vm850, %v839
      %858 = vst.msk [vmem:[#allocation3 + $0x38] sm:$0xff] %vm850, %v841
      %s859 = scalar_lea.vmem %s802, 1 [#allocation2]
      %v860 = vld [vmem:[%s859] ss:$2 sm:$0xff]
      %s861 = scalar_lea.vmem %s802, 49 [#allocation2]
      %v862 = vld [vmem:[%s861] ss:$2 sm:$0xff]
      %s863 = scalar_lea.vmem %s802, 97 [#allocation2]
      %v864 = vld [vmem:[%s863] ss:$2 sm:$0xff]
      %s865 = scalar_lea.vmem %s802, 145 [#allocation2]
      %v866 = vld [vmem:[%s865] ss:$2 sm:$0xff]
      %s867 = scalar_lea.vmem %s802, 193 [#allocation2]
      %v868 = vld [vmem:[%s867] ss:$2 sm:$0xff]
      %s869 = scalar_lea.vmem %s802, 241 [#allocation2]
      %v870 = vld [vmem:[%s869] ss:$2 sm:$0xff]
      %s871 = scalar_lea.vmem %s802, 289 [#allocation2]
      %v872 = vld [vmem:[%s871] ss:$2 sm:$0xff]
      %s873 = scalar_lea.vmem %s802, 337 [#allocation2]
      %v874 = vld [vmem:[%s873] ss:$2 sm:$0xff]
      %883 = vrot.lane.b32.xlu0 %v860, 28
      %v884 = vpop.permute.xlu0 %883
      %885 = vrot.lane.b32.xlu0 %v862, 28
      %v886 = vpop.permute.xlu0 %885
      %887 = vrot.lane.b32.xlu0 %v864, 28
      %v888 = vpop.permute.xlu0 %887
      %889 = vrot.lane.b32.xlu0 %v866, 28
      %v890 = vpop.permute.xlu0 %889
      %891 = vrot.lane.b32.xlu0 %v868, 28
      %v892 = vpop.permute.xlu0 %891
      %893 = vrot.lane.b32.xlu0 %v870, 28
      %v894 = vpop.permute.xlu0 %893
      %895 = vrot.lane.b32.xlu0 %v872, 28
      %v896 = vpop.permute.xlu0 %895
      %897 = vrot.lane.b32.xlu0 %v874, 28
      %v898 = vpop.permute.xlu0 %897
      %vm907 = vcmask 261344
      %908 = vst.msk [vmem:[#allocation3] sm:$0xff] %vm907, %v884
      %909 = vst.msk [vmem:[#allocation3 + $0x8] sm:$0xff] %vm907, %v886
      %910 = vst.msk [vmem:[#allocation3 + $0x10] sm:$0xff] %vm907, %v888
      %911 = vst.msk [vmem:[#allocation3 + $0x18] sm:$0xff] %vm907, %v890
      %912 = vst.msk [vmem:[#allocation3 + $0x20] sm:$0xff] %vm907, %v892
      %913 = vst.msk [vmem:[#allocation3 + $0x28] sm:$0xff] %vm907, %v894
      %914 = vst.msk [vmem:[#allocation3 + $0x30] sm:$0xff] %vm907, %v896
      %915 = vst.msk [vmem:[#allocation3 + $0x38] sm:$0xff] %vm907, %v898
      %s916 = scalar_lea.vmem %s802, 2 [#allocation2]
      %v917 = vld [vmem:[%s916] ss:$2 sm:$0xff]
      %s918 = scalar_lea.vmem %s802, 50 [#allocation2]
      %v919 = vld [vmem:[%s918] ss:$2 sm:$0xff]
      %s920 = scalar_lea.vmem %s802, 98 [#allocation2]
      %v921 = vld [vmem:[%s920] ss:$2 sm:$0xff]
      %s922 = scalar_lea.vmem %s802, 146 [#allocation2]
      %v923 = vld [vmem:[%s922] ss:$2 sm:$0xff]
      %s924 = scalar_lea.vmem %s802, 194 [#allocation2]
      %v925 = vld [vmem:[%s924] ss:$2 sm:$0xff]
      %s926 = scalar_lea.vmem %s802, 242 [#allocation2]
      %v927 = vld [vmem:[%s926] ss:$2 sm:$0xff]
      %s928 = scalar_lea.vmem %s802, 290 [#allocation2]
      %v929 = vld [vmem:[%s928] ss:$2 sm:$0xff]
      %s930 = scalar_lea.vmem %s802, 338 [#allocation2]
      %v931 = vld [vmem:[%s930] ss:$2 sm:$0xff]
      %940 = vrot.lane.b32.xlu0 %v917, 32
      %v941 = vpop.permute.xlu0 %940
      %942 = vrot.lane.b32.xlu0 %v919, 32
      %v943 = vpop.permute.xlu0 %942
      %944 = vrot.lane.b32.xlu0 %v921, 32
      %v945 = vpop.permute.xlu0 %944
      %946 = vrot.lane.b32.xlu0 %v923, 32
      %v947 = vpop.permute.xlu0 %946
      %948 = vrot.lane.b32.xlu0 %v925, 32
      %v949 = vpop.permute.xlu0 %948
      %950 = vrot.lane.b32.xlu0 %v927, 32
      %v951 = vpop.permute.xlu0 %950
      %952 = vrot.lane.b32.xlu0 %v929, 32
      %v953 = vpop.permute.xlu0 %952
      %954 = vrot.lane.b32.xlu0 %v931, 32
      %v955 = vpop.permute.xlu0 %954
      %vm964 = vcmask 294144
      %965 = vst.msk [vmem:[#allocation3] sm:$0xff] %vm964, %v941
      %966 = vst.msk [vmem:[#allocation3 + $0x8] sm:$0xff] %vm964, %v943
      %967 = vst.msk [vmem:[#allocation3 + $0x10] sm:$0xff] %vm964, %v945
      %968 = vst.msk [vmem:[#allocation3 + $0x18] sm:$0xff] %vm964, %v947
      %969 = vst.msk [vmem:[#allocation3 + $0x20] sm:$0xff] %vm964, %v949
      %970 = vst.msk [vmem:[#allocation3 + $0x28] sm:$0xff] %vm964, %v951
      %971 = vst.msk [vmem:[#allocation3 + $0x30] sm:$0xff] %vm964, %v953
      %972 = vst.msk [vmem:[#allocation3 + $0x38] sm:$0xff] %vm964, %v955
      %v973 = vld [vmem:[#allocation3] sm:$0xff]
      %v974 = vld [vmem:[#allocation3 + $0x8] sm:$0xff]
      %v975 = vld [vmem:[#allocation3 + $0x10] sm:$0xff]
      %v976 = vld [vmem:[#allocation3 + $0x18] sm:$0xff]
      %v977 = vld [vmem:[#allocation3 + $0x20] sm:$0xff]
      %v978 = vld [vmem:[#allocation3 + $0x28] sm:$0xff]
      %v979 = vld [vmem:[#allocation3 + $0x30] sm:$0xff]
      %v980 = vld [vmem:[#allocation3 + $0x38] sm:$0xff]
      %v981 = vpack.c.bf16 %v974, %v973
      %v982 = vpack.c.bf16 %v976, %v975
      %v983 = vpack.c.bf16 %v978, %v977
      %v984 = vpack.c.bf16 %v980, %v979
      %v985 = vld [vmem:[%s3] sm:$0xf]
      %v986 = vld [vmem:[%s3 + $0x4] sm:$0xf]
      %v987 = vld [vmem:[%s3 + $0x8] sm:$0xf]
      %v988 = vld [vmem:[%s3 + $0xc] sm:$0xf]
      %v989 = vld [vmem:[%s3 + $0x10] sm:$0x3]
      %v990 = vpack.c.bf16 %v691, %v689
      %v991 = vpack.c.bf16 %v695, %v693
      %v992 = vpack.c.bf16 %v699, %v697
      %v993 = vpack.c.bf16 %v703, %v701
      %v994 = vld [vmem:[%s6] sm:$0x3]
      %v995 = vld [vmem:[%s4] sm:$0x1]
      %v997 = vperm.slane %v995, 0
      %v1004 = vunpack.c.l.b16 %v985
      %v1005 = vunpack.c.l.b16 %v986
      %v1006 = vunpack.c.l.b16 %v987
      %v1007 = vunpack.c.l.b16 %v988
      %v1008 = vunpack.c.l.b16 %v989
      %v1009 = vpack.c.b16 %v1005, %v1004
      %v1010 = vpack.c.b16 %v1007, %v1006
      %v1011 = vpack.c.b16 %v1008, %v1008
      %vm1014 = vcmask 293888
      %v1016 = vsel %vm1014, %v981, 0
      %v1019 = vsel %vm1014, %v982, 0
      %v1022 = vsel %vm1014, %v983, 0
      %v1025 = vsel %vm1014, %v984, 0
      %vm1027 = vcmask 1041408
      %v1029 = vsel %vm1027, %v1011, 0
      %1031 = vmatpush.bf16.msra.mxu0 0
      %1032 = vmatpush.bf16.msra.mxu0 0
      %1033 = vmatpush.bf16.msra.mxu0 0
      %1034 = vmatpush.bf16.msra.mxu0 0
      %1035 = vmatpush.bf16.msra.mxu0 0
      %1036 = vmatpush.bf16.msra.mxu0 %v1029
      %1037 = vmatpush.bf16.msra.mxu0 %v1010
      %1038 = vmatpush.bf16.msra.mxu0 %v1009
      %1039 = vmatmul.bf16.gmra.mxu0 %v1016
      %v1040 = vpop.f32.mrf.mxu0
      %v1041 = vadd.f32 %v997, %v1040
      %v1042 = vpop.f32.mrf.mxu0
      %v1043 = vadd.f32 %v997, %v1042
      %1044 = vmatmul.bf16.gmra.mxu0 %v1019
      %v1045 = vpop.f32.mrf.mxu0
      %v1046 = vadd.f32 %v997, %v1045
      %v1047 = vpop.f32.mrf.mxu0
      %v1048 = vadd.f32 %v997, %v1047
      %1049 = vmatmul.bf16.gmra.mxu0 %v1022
      %v1050 = vpop.f32.mrf.mxu0
      %v1051 = vadd.f32 %v997, %v1050
      %v1052 = vpop.f32.mrf.mxu0
      %v1053 = vadd.f32 %v997, %v1052
      %1054 = vmatmul.bf16.gmra.mxu0 %v1025
      %v1055 = vpop.f32.mrf.mxu0
      %v1056 = vadd.f32 %v997, %v1055
      %v1057 = vpop.f32.mrf.mxu0
      %v1058 = vadd.f32 %v997, %v1057
      %1059 = vdwg.mxu0
      %v1060 = vmax.f32 %v1041, 0.0
      %v1061 = vmax.f32 %v1043, 0.0
      %v1062 = vmax.f32 %v1046, 0.0
      %v1063 = vmax.f32 %v1048, 0.0
      %v1064 = vmax.f32 %v1051, 0.0
      %v1065 = vmax.f32 %v1053, 0.0
      %v1066 = vmax.f32 %v1056, 0.0
      %v1067 = vmax.f32 %v1058, 0.0
      %vm1068 = vcmask 64512
      %1069 = vst.msk [vmem:[#allocation4] sm:$0xff] %vm1068, 0.0
      %vm1070 = vcmask 58368
      %1071 = vst.msk [vmem:[#allocation4 + $0x8] sm:$0x3] %vm1070, 0.0
      %s1072 = scalar_lea.vmem [#allocation4], 144
      %1073 = vst.msk [vmem:[%s1072] sm:$0xff] %vm1068, 0.0
      %1074 = vst.msk [vmem:[%s1072 + $0x8] sm:$0x3] %vm1070, 0.0
      %vm1075 = vcmask 57344
      %1076 = vst.msk [vmem:[#allocation4] sm:$0x1] %vm1075, 0.0
      %1077 = vst.msk [vmem:[#allocation4 + $0x10] sm:$0x1] %vm1075, 0.0
      %1078 = vst.msk [vmem:[#allocation4 + $0x20] sm:$0x1] %vm1075, 0.0
      %1079 = vst.msk [vmem:[#allocation4 + $0x30] sm:$0x1] %vm1075, 0.0
      %1080 = vst.msk [vmem:[#allocation4 + $0x40] sm:$0x1] %vm1075, 0.0
      %1081 = vst.msk [vmem:[#allocation4 + $0x50] sm:$0x1] %vm1075, 0.0
      %1082 = vst.msk [vmem:[#allocation4 + $0x60] sm:$0x1] %vm1075, 0.0
      %1083 = vst.msk [vmem:[#allocation4 + $0x70] sm:$0x1] %vm1075, 0.0
      %1084 = vst.msk [vmem:[#allocation4 + $0x80] sm:$0x1] %vm1075, 0.0
      %1085 = vst.msk [vmem:[#allocation4 + $0x90] sm:$0x1] %vm1075, 0.0
      %1086 = vst.msk [vmem:[#allocation4 + $0x9] sm:$0x1] %vm1075, 0.0
      %1087 = vst.msk [vmem:[#allocation4 + $0x19] sm:$0x1] %vm1075, 0.0
      %1088 = vst.msk [vmem:[#allocation4 + $0x29] sm:$0x1] %vm1075, 0.0
      %1089 = vst.msk [vmem:[#allocation4 + $0x39] sm:$0x1] %vm1075, 0.0
      %1090 = vst.msk [vmem:[#allocation4 + $0x49] sm:$0x1] %vm1075, 0.0
      %1091 = vst.msk [vmem:[#allocation4 + $0x59] sm:$0x1] %vm1075, 0.0
      %1092 = vst.msk [vmem:[#allocation4 + $0x69] sm:$0x1] %vm1075, 0.0
      %1093 = vst.msk [vmem:[#allocation4 + $0x79] sm:$0x1] %vm1075, 0.0
      %1094 = vst.msk [vmem:[#allocation4 + $0x89] sm:$0x1] %vm1075, 0.0
      %1095 = vst.msk [vmem:[#allocation4 + $0x99] sm:$0x1] %vm1075, 0.0
      %s1096 = scalar_lea.vmem [#allocation4], 16
      %1097 = vst.msk [vmem:[%s1096 + $0x1] sm:$0xff] %vm1068, %v1060
      %1098 = vst.msk [vmem:[%s1096 + $0x11] sm:$0xff] %vm1068, %v1061
      %1099 = vst.msk [vmem:[%s1096 + $0x21] sm:$0xff] %vm1068, %v1062
      %1100 = vst.msk [vmem:[%s1096 + $0x31] sm:$0xff] %vm1068, %v1063
      %1101 = vst.msk [vmem:[%s1096 + $0x41] sm:$0xff] %vm1068, %v1064
      %1102 = vst.msk [vmem:[%s1096 + $0x51] sm:$0xff] %vm1068, %v1065
      %1103 = vst.msk [vmem:[%s1096 + $0x61] sm:$0xff] %vm1068, %v1066
      %1104 = vst.msk [vmem:[%s1096 + $0x71] sm:$0xff] %vm1068, %v1067
      %v1105 = vld [vmem:[#allocation4] sm:$0xff]
      %v1106 = vld [vmem:[#allocation4 + $0x10] sm:$0xff]
      %v1107 = vld [vmem:[#allocation4 + $0x20] sm:$0xff]
      %v1108 = vld [vmem:[#allocation4 + $0x30] sm:$0xff]
      %v1109 = vld [vmem:[#allocation4 + $0x40] sm:$0xff]
      %v1110 = vld [vmem:[#allocation4 + $0x50] sm:$0xff]
      %v1111 = vld [vmem:[#allocation4 + $0x60] sm:$0xff]
      %v1112 = vld [vmem:[#allocation4 + $0x70] sm:$0xff]
      %1113 = vst.msk [vmem:[#allocation5] sm:$0xff] %vm1068, %v1105
      %1114 = vst.msk [vmem:[#allocation5 + $0x8] sm:$0xff] %vm1068, %v1106
      %1115 = vst.msk [vmem:[#allocation5 + $0x10] sm:$0xff] %vm1068, %v1107
      %1116 = vst.msk [vmem:[#allocation5 + $0x18] sm:$0xff] %vm1068, %v1108
      %1117 = vst.msk [vmem:[#allocation5 + $0x20] sm:$0xff] %vm1068, %v1109
      %1118 = vst.msk [vmem:[#allocation5 + $0x28] sm:$0xff] %vm1068, %v1110
      %1119 = vst.msk [vmem:[#allocation5 + $0x30] sm:$0xff] %vm1068, %v1111
      %1120 = vst.msk [vmem:[#allocation5 + $0x38] sm:$0xff] %vm1068, %v1112
      %v1121 = vld [vmem:[#allocation4 + $0x1] sm:$0xff]
      %v1122 = vld [vmem:[#allocation4 + $0x11] sm:$0xff]
      %v1123 = vld [vmem:[#allocation4 + $0x21] sm:$0xff]
      %v1124 = vld [vmem:[#allocation4 + $0x31] sm:$0xff]
      %v1125 = vld [vmem:[#allocation4 + $0x41] sm:$0xff]
      %v1126 = vld [vmem:[#allocation4 + $0x51] sm:$0xff]
      %v1127 = vld [vmem:[#allocation4 + $0x61] sm:$0xff]
      %v1128 = vld [vmem:[#allocation4 + $0x71] sm:$0xff]
      %1137 = vrot.lane.b32.xlu0 %v1121, 8
      %v1138 = vpop.permute.xlu0 %1137
      %1139 = vrot.lane.b32.xlu0 %v1122, 8
      %v1140 = vpop.permute.xlu0 %1139
      %1141 = vrot.lane.b32.xlu0 %v1123, 8
      %v1142 = vpop.permute.xlu0 %1141
      %1143 = vrot.lane.b32.xlu0 %v1124, 8
      %v1144 = vpop.permute.xlu0 %1143
      %1145 = vrot.lane.b32.xlu0 %v1125, 8
      %v1146 = vpop.permute.xlu0 %1145
      %1147 = vrot.lane.b32.xlu0 %v1126, 8
      %v1148 = vpop.permute.xlu0 %1147
      %1149 = vrot.lane.b32.xlu0 %v1127, 8
      %v1150 = vpop.permute.xlu0 %1149
      %1151 = vrot.lane.b32.xlu0 %v1128, 8
      %v1152 = vpop.permute.xlu0 %1151
      %vm1161 = vcmask 130112
      %1162 = vst.msk [vmem:[#allocation5] sm:$0xff] %vm1161, %v1138
      %1163 = vst.msk [vmem:[#allocation5 + $0x8] sm:$0xff] %vm1161, %v1140
      %1164 = vst.msk [vmem:[#allocation5 + $0x10] sm:$0xff] %vm1161, %v1142
      %1165 = vst.msk [vmem:[#allocation5 + $0x18] sm:$0xff] %vm1161, %v1144
      %1166 = vst.msk [vmem:[#allocation5 + $0x20] sm:$0xff] %vm1161, %v1146
      %1167 = vst.msk [vmem:[#allocation5 + $0x28] sm:$0xff] %vm1161, %v1148
      %1168 = vst.msk [vmem:[#allocation5 + $0x30] sm:$0xff] %vm1161, %v1150
      %1169 = vst.msk [vmem:[#allocation5 + $0x38] sm:$0xff] %vm1161, %v1152
      %v1170 = vld [vmem:[#allocation4 + $0x2] sm:$0xff]
      %v1171 = vld [vmem:[#allocation4 + $0x12] sm:$0xff]
      %v1172 = vld [vmem:[#allocation4 + $0x22] sm:$0xff]
      %v1173 = vld [vmem:[#allocation4 + $0x32] sm:$0xff]
      %v1174 = vld [vmem:[#allocation4 + $0x42] sm:$0xff]
      %v1175 = vld [vmem:[#allocation4 + $0x52] sm:$0xff]
      %v1176 = vld [vmem:[#allocation4 + $0x62] sm:$0xff]
      %v1177 = vld [vmem:[#allocation4 + $0x72] sm:$0xff]
      %1186 = vrot.lane.b32.xlu0 %v1170, 16
      %v1187 = vpop.permute.xlu0 %1186
      %1188 = vrot.lane.b32.xlu0 %v1171, 16
      %v1189 = vpop.permute.xlu0 %1188
      %1190 = vrot.lane.b32.xlu0 %v1172, 16
      %v1191 = vpop.permute.xlu0 %1190
      %1192 = vrot.lane.b32.xlu0 %v1173, 16
      %v1193 = vpop.permute.xlu0 %1192
      %1194 = vrot.lane.b32.xlu0 %v1174, 16
      %v1195 = vpop.permute.xlu0 %1194
      %1196 = vrot.lane.b32.xlu0 %v1175, 16
      %v1197 = vpop.permute.xlu0 %1196
      %1198 = vrot.lane.b32.xlu0 %v1176, 16
      %v1199 = vpop.permute.xlu0 %1198
      %1200 = vrot.lane.b32.xlu0 %v1177, 16
      %v1201 = vpop.permute.xlu0 %1200
      %vm1210 = vcmask 195712
      %1211 = vst.msk [vmem:[#allocation5] sm:$0xff] %vm1210, %v1187
      %1212 = vst.msk [vmem:[#allocation5 + $0x8] sm:$0xff] %vm1210, %v1189
      %1213 = vst.msk [vmem:[#allocation5 + $0x10] sm:$0xff] %vm1210, %v1191
      %1214 = vst.msk [vmem:[#allocation5 + $0x18] sm:$0xff] %vm1210, %v1193
      %1215 = vst.msk [vmem:[#allocation5 + $0x20] sm:$0xff] %vm1210, %v1195
      %1216 = vst.msk [vmem:[#allocation5 + $0x28] sm:$0xff] %vm1210, %v1197
      %1217 = vst.msk [vmem:[#allocation5 + $0x30] sm:$0xff] %vm1210, %v1199
      %1218 = vst.msk [vmem:[#allocation5 + $0x38] sm:$0xff] %vm1210, %v1201
      %v1219 = vld [vmem:[%s1096] sm:$0xff]
      %v1220 = vld [vmem:[%s1096 + $0x10] sm:$0xff]
      %v1221 = vld [vmem:[%s1096 + $0x20] sm:$0xff]
      %v1222 = vld [vmem:[%s1096 + $0x30] sm:$0xff]
      %v1223 = vld [vmem:[%s1096 + $0x40] sm:$0xff]
      %v1224 = vld [vmem:[%s1096 + $0x50] sm:$0xff]
      %v1225 = vld [vmem:[%s1096 + $0x60] sm:$0xff]
      %v1226 = vld [vmem:[%s1096 + $0x70] sm:$0xff]
      %1235 = vrot.lane.b32.xlu0 %v1219, 24
      %v1236 = vpop.permute.xlu0 %1235
      %1237 = vrot.lane.b32.xlu0 %v1220, 24
      %v1238 = vpop.permute.xlu0 %1237
      %1239 = vrot.lane.b32.xlu0 %v1221, 24
      %v1240 = vpop.permute.xlu0 %1239
      %1241 = vrot.lane.b32.xlu0 %v1222, 24
      %v1242 = vpop.permute.xlu0 %1241
      %1243 = vrot.lane.b32.xlu0 %v1223, 24
      %v1244 = vpop.permute.xlu0 %1243
      %1245 = vrot.lane.b32.xlu0 %v1224, 24
      %v1246 = vpop.permute.xlu0 %1245
      %1247 = vrot.lane.b32.xlu0 %v1225, 24
      %v1248 = vpop.permute.xlu0 %1247
      %1249 = vrot.lane.b32.xlu0 %v1226, 24
      %v1250 = vpop.permute.xlu0 %1249
      %vm1259 = vcmask 261312
      %1260 = vst.msk [vmem:[#allocation5] sm:$0xff] %vm1259, %v1236
      %1261 = vst.msk [vmem:[#allocation5 + $0x8] sm:$0xff] %vm1259, %v1238
      %1262 = vst.msk [vmem:[#allocation5 + $0x10] sm:$0xff] %vm1259, %v1240
      %1263 = vst.msk [vmem:[#allocation5 + $0x18] sm:$0xff] %vm1259, %v1242
      %1264 = vst.msk [vmem:[#allocation5 + $0x20] sm:$0xff] %vm1259, %v1244
      %1265 = vst.msk [vmem:[#allocation5 + $0x28] sm:$0xff] %vm1259, %v1246
      %1266 = vst.msk [vmem:[#allocation5 + $0x30] sm:$0xff] %vm1259, %v1248
      %1267 = vst.msk [vmem:[#allocation5 + $0x38] sm:$0xff] %vm1259, %v1250
      %v1268 = vld [vmem:[%s1096 + $0x1] sm:$0xff]
      %v1269 = vld [vmem:[%s1096 + $0x11] sm:$0xff]
      %v1270 = vld [vmem:[%s1096 + $0x21] sm:$0xff]
      %v1271 = vld [vmem:[%s1096 + $0x31] sm:$0xff]
      %v1272 = vld [vmem:[%s1096 + $0x41] sm:$0xff]
      %v1273 = vld [vmem:[%s1096 + $0x51] sm:$0xff]
      %v1274 = vld [vmem:[%s1096 + $0x61] sm:$0xff]
      %v1275 = vld [vmem:[%s1096 + $0x71] sm:$0xff]
      %1284 = vrot.lane.b32.xlu0 %v1268, 32
      %v1285 = vpop.permute.xlu0 %1284
      %1286 = vrot.lane.b32.xlu0 %v1269, 32
      %v1287 = vpop.permute.xlu0 %1286
      %1288 = vrot.lane.b32.xlu0 %v1270, 32
      %v1289 = vpop.permute.xlu0 %1288
      %1290 = vrot.lane.b32.xlu0 %v1271, 32
      %v1291 = vpop.permute.xlu0 %1290
      %1292 = vrot.lane.b32.xlu0 %v1272, 32
      %v1293 = vpop.permute.xlu0 %1292
      %1294 = vrot.lane.b32.xlu0 %v1273, 32
      %v1295 = vpop.permute.xlu0 %1294
      %1296 = vrot.lane.b32.xlu0 %v1274, 32
      %v1297 = vpop.permute.xlu0 %1296
      %1298 = vrot.lane.b32.xlu0 %v1275, 32
      %v1299 = vpop.permute.xlu0 %1298
      %vm1308 = vcmask 326912
      %1309 = vst.msk [vmem:[#allocation5] sm:$0xff] %vm1308, %v1285
      %1310 = vst.msk [vmem:[#allocation5 + $0x8] sm:$0xff] %vm1308, %v1287
      %1311 = vst.msk [vmem:[#allocation5 + $0x10] sm:$0xff] %vm1308, %v1289
      %1312 = vst.msk [vmem:[#allocation5 + $0x18] sm:$0xff] %vm1308, %v1291
      %1313 = vst.msk [vmem:[#allocation5 + $0x20] sm:$0xff] %vm1308, %v1293
      %1314 = vst.msk [vmem:[#allocation5 + $0x28] sm:$0xff] %vm1308, %v1295
      %1315 = vst.msk [vmem:[#allocation5 + $0x30] sm:$0xff] %vm1308, %v1297
      %1316 = vst.msk [vmem:[#allocation5 + $0x38] sm:$0xff] %vm1308, %v1299
      %v1317 = vld [vmem:[%s1096 + $0x2] sm:$0xff]
      %v1318 = vld [vmem:[%s1096 + $0x12] sm:$0xff]
      %v1319 = vld [vmem:[%s1096 + $0x22] sm:$0xff]
      %v1320 = vld [vmem:[%s1096 + $0x32] sm:$0xff]
      %v1321 = vld [vmem:[%s1096 + $0x42] sm:$0xff]
      %v1322 = vld [vmem:[%s1096 + $0x52] sm:$0xff]
      %v1323 = vld [vmem:[%s1096 + $0x62] sm:$0xff]
      %v1324 = vld [vmem:[%s1096 + $0x72] sm:$0xff]
      %1333 = vrot.lane.b32.xlu0 %v1317, 40
      %v1334 = vpop.permute.xlu0 %1333
      %1335 = vrot.lane.b32.xlu0 %v1318, 40
      %v1336 = vpop.permute.xlu0 %1335
      %1337 = vrot.lane.b32.xlu0 %v1319, 40
      %v1338 = vpop.permute.xlu0 %1337
      %1339 = vrot.lane.b32.xlu0 %v1320, 40
      %v1340 = vpop.permute.xlu0 %1339
      %1341 = vrot.lane.b32.xlu0 %v1321, 40
      %v1342 = vpop.permute.xlu0 %1341
      %1343 = vrot.lane.b32.xlu0 %v1322, 40
      %v1344 = vpop.permute.xlu0 %1343
      %1345 = vrot.lane.b32.xlu0 %v1323, 40
      %v1346 = vpop.permute.xlu0 %1345
      %1347 = vrot.lane.b32.xlu0 %v1324, 40
      %v1348 = vpop.permute.xlu0 %1347
      %vm1357 = vcmask 392512
      %1358 = vst.msk [vmem:[#allocation5] sm:$0xff] %vm1357, %v1334
      %1359 = vst.msk [vmem:[#allocation5 + $0x8] sm:$0xff] %vm1357, %v1336
      %1360 = vst.msk [vmem:[#allocation5 + $0x10] sm:$0xff] %vm1357, %v1338
      %1361 = vst.msk [vmem:[#allocation5 + $0x18] sm:$0xff] %vm1357, %v1340
      %1362 = vst.msk [vmem:[#allocation5 + $0x20] sm:$0xff] %vm1357, %v1342
      %1363 = vst.msk [vmem:[#allocation5 + $0x28] sm:$0xff] %vm1357, %v1344
      %1364 = vst.msk [vmem:[#allocation5 + $0x30] sm:$0xff] %vm1357, %v1346
      %1365 = vst.msk [vmem:[#allocation5 + $0x38] sm:$0xff] %vm1357, %v1348
      %s1366 = scalar_lea.vmem [#allocation4], 32
      %v1367 = vld [vmem:[%s1366] sm:$0xff]
      %v1368 = vld [vmem:[%s1366 + $0x10] sm:$0xff]
      %v1369 = vld [vmem:[%s1366 + $0x20] sm:$0xff]
      %v1370 = vld [vmem:[%s1366 + $0x30] sm:$0xff]
      %v1371 = vld [vmem:[%s1366 + $0x40] sm:$0xff]
      %v1372 = vld [vmem:[%s1366 + $0x50] sm:$0xff]
      %v1373 = vld [vmem:[%s1366 + $0x60] sm:$0xff]
      %v1374 = vld [vmem:[%s1366 + $0x70] sm:$0xff]
      %1383 = vrot.lane.b32.xlu0 %v1367, 48
      %v1384 = vpop.permute.xlu0 %1383
      %1385 = vrot.lane.b32.xlu0 %v1368, 48
      %v1386 = vpop.permute.xlu0 %1385
      %1387 = vrot.lane.b32.xlu0 %v1369, 48
      %v1388 = vpop.permute.xlu0 %1387
      %1389 = vrot.lane.b32.xlu0 %v1370, 48
      %v1390 = vpop.permute.xlu0 %1389
      %1391 = vrot.lane.b32.xlu0 %v1371, 48
      %v1392 = vpop.permute.xlu0 %1391
      %1393 = vrot.lane.b32.xlu0 %v1372, 48
      %v1394 = vpop.permute.xlu0 %1393
      %1395 = vrot.lane.b32.xlu0 %v1373, 48
      %v1396 = vpop.permute.xlu0 %1395
      %1397 = vrot.lane.b32.xlu0 %v1374, 48
      %v1398 = vpop.permute.xlu0 %1397
      %vm1407 = vcmask 458112
      %1408 = vst.msk [vmem:[#allocation5] sm:$0xff] %vm1407, %v1384
      %1409 = vst.msk [vmem:[#allocation5 + $0x8] sm:$0xff] %vm1407, %v1386
      %1410 = vst.msk [vmem:[#allocation5 + $0x10] sm:$0xff] %vm1407, %v1388
      %1411 = vst.msk [vmem:[#allocation5 + $0x18] sm:$0xff] %vm1407, %v1390
      %1412 = vst.msk [vmem:[#allocation5 + $0x20] sm:$0xff] %vm1407, %v1392
      %1413 = vst.msk [vmem:[#allocation5 + $0x28] sm:$0xff] %vm1407, %v1394
      %1414 = vst.msk [vmem:[#allocation5 + $0x30] sm:$0xff] %vm1407, %v1396
      %1415 = vst.msk [vmem:[#allocation5 + $0x38] sm:$0xff] %vm1407, %v1398
      %v1416 = vld [vmem:[%s1366 + $0x1] sm:$0xff]
      %v1417 = vld [vmem:[%s1366 + $0x11] sm:$0xff]
      %v1418 = vld [vmem:[%s1366 + $0x21] sm:$0xff]
      %v1419 = vld [vmem:[%s1366 + $0x31] sm:$0xff]
      %v1420 = vld [vmem:[%s1366 + $0x41] sm:$0xff]
      %v1421 = vld [vmem:[%s1366 + $0x51] sm:$0xff]
      %v1422 = vld [vmem:[%s1366 + $0x61] sm:$0xff]
      %v1423 = vld [vmem:[%s1366 + $0x71] sm:$0xff]
      %1432 = vrot.lane.b32.xlu0 %v1416, 56
      %v1433 = vpop.permute.xlu0 %1432
      %1434 = vrot.lane.b32.xlu0 %v1417, 56
      %v1435 = vpop.permute.xlu0 %1434
      %1436 = vrot.lane.b32.xlu0 %v1418, 56
      %v1437 = vpop.permute.xlu0 %1436
      %1438 = vrot.lane.b32.xlu0 %v1419, 56
      %v1439 = vpop.permute.xlu0 %1438
      %1440 = vrot.lane.b32.xlu0 %v1420, 56
      %v1441 = vpop.permute.xlu0 %1440
      %1442 = vrot.lane.b32.xlu0 %v1421, 56
      %v1443 = vpop.permute.xlu0 %1442
      %1444 = vrot.lane.b32.xlu0 %v1422, 56
      %v1445 = vpop.permute.xlu0 %1444
      %1446 = vrot.lane.b32.xlu0 %v1423, 56
      %v1447 = vpop.permute.xlu0 %1446
      %vm1456 = vcmask 523712
      %1457 = vst.msk [vmem:[#allocation5] sm:$0xff] %vm1456, %v1433
      %1458 = vst.msk [vmem:[#allocation5 + $0x8] sm:$0xff] %vm1456, %v1435
      %1459 = vst.msk [vmem:[#allocation5 + $0x10] sm:$0xff] %vm1456, %v1437
      %1460 = vst.msk [vmem:[#allocation5 + $0x18] sm:$0xff] %vm1456, %v1439
      %1461 = vst.msk [vmem:[#allocation5 + $0x20] sm:$0xff] %vm1456, %v1441
      %1462 = vst.msk [vmem:[#allocation5 + $0x28] sm:$0xff] %vm1456, %v1443
      %1463 = vst.msk [vmem:[#allocation5 + $0x30] sm:$0xff] %vm1456, %v1445
      %1464 = vst.msk [vmem:[#allocation5 + $0x38] sm:$0xff] %vm1456, %v1447
      %v1465 = vld [vmem:[%s1366 + $0x2] sm:$0xff]
      %v1466 = vld [vmem:[%s1366 + $0x12] sm:$0xff]
      %v1467 = vld [vmem:[%s1366 + $0x22] sm:$0xff]
      %v1468 = vld [vmem:[%s1366 + $0x32] sm:$0xff]
      %v1469 = vld [vmem:[%s1366 + $0x42] sm:$0xff]
      %v1470 = vld [vmem:[%s1366 + $0x52] sm:$0xff]
      %v1471 = vld [vmem:[%s1366 + $0x62] sm:$0xff]
      %v1472 = vld [vmem:[%s1366 + $0x72] sm:$0xff]
      %1481 = vrot.lane.b32.xlu0 %v1465, 64
      %v1482 = vpop.permute.xlu0 %1481
      %1483 = vrot.lane.b32.xlu0 %v1466, 64
      %v1484 = vpop.permute.xlu0 %1483
      %1485 = vrot.lane.b32.xlu0 %v1467, 64
      %v1486 = vpop.permute.xlu0 %1485
      %1487 = vrot.lane.b32.xlu0 %v1468, 64
      %v1488 = vpop.permute.xlu0 %1487
      %1489 = vrot.lane.b32.xlu0 %v1469, 64
      %v1490 = vpop.permute.xlu0 %1489
      %1491 = vrot.lane.b32.xlu0 %v1470, 64
      %v1492 = vpop.permute.xlu0 %1491
      %1493 = vrot.lane.b32.xlu0 %v1471, 64
      %v1494 = vpop.permute.xlu0 %1493
      %1495 = vrot.lane.b32.xlu0 %v1472, 64
      %v1496 = vpop.permute.xlu0 %1495
      %vm1505 = vcmask 589312
      %1506 = vst.msk [vmem:[#allocation5] sm:$0xff] %vm1505, %v1482
      %1507 = vst.msk [vmem:[#allocation5 + $0x8] sm:$0xff] %vm1505, %v1484
      %1508 = vst.msk [vmem:[#allocation5 + $0x10] sm:$0xff] %vm1505, %v1486
      %1509 = vst.msk [vmem:[#allocation5 + $0x18] sm:$0xff] %vm1505, %v1488
      %1510 = vst.msk [vmem:[#allocation5 + $0x20] sm:$0xff] %vm1505, %v1490
      %1511 = vst.msk [vmem:[#allocation5 + $0x28] sm:$0xff] %vm1505, %v1492
      %1512 = vst.msk [vmem:[#allocation5 + $0x30] sm:$0xff] %vm1505, %v1494
      %1513 = vst.msk [vmem:[#allocation5 + $0x38] sm:$0xff] %vm1505, %v1496
      %v1514 = vld [vmem:[#allocation5] sm:$0xff]
      %v1515 = vld [vmem:[#allocation5 + $0x8] sm:$0xff]
      %v1516 = vld [vmem:[#allocation5 + $0x10] sm:$0xff]
      %v1517 = vld [vmem:[#allocation5 + $0x18] sm:$0xff]
      %v1518 = vld [vmem:[#allocation5 + $0x20] sm:$0xff]
      %v1519 = vld [vmem:[#allocation5 + $0x28] sm:$0xff]
      %v1520 = vld [vmem:[#allocation5 + $0x30] sm:$0xff]
      %v1521 = vld [vmem:[#allocation5 + $0x38] sm:$0xff]
      %v1522 = vpack.c.bf16 %v1515, %v1514
      %v1523 = vpack.c.bf16 %v1517, %v1516
      %v1524 = vpack.c.bf16 %v1519, %v1518
      %v1525 = vpack.c.bf16 %v1521, %v1520
      %v1526 = vld [vmem:[%s5] sm:$0xf]
      %v1527 = vld [vmem:[%s5 + $0x4] sm:$0xf]
      %v1528 = vld [vmem:[%s5 + $0x8] sm:$0xf]
      %v1529 = vld [vmem:[%s5 + $0xc] sm:$0xf]
      %v1530 = vld [vmem:[%s5 + $0x10] sm:$0xf]
      %v1531 = vld [vmem:[%s5 + $0x14] sm:$0xf]
      %v1532 = vld [vmem:[%s5 + $0x18] sm:$0xf]
      %v1533 = vld [vmem:[%s5 + $0x1c] sm:$0xf]
      %v1534 = vld [vmem:[%s5 + $0x20] sm:$0xf]
      %v1544 = vunpack.c.l.b16 %v1526
      %v1545 = vunpack.c.l.b16 %v1527
      %v1546 = vunpack.c.l.b16 %v1528
      %v1547 = vunpack.c.l.b16 %v1529
      %v1548 = vunpack.c.l.b16 %v1530
      %v1549 = vunpack.c.l.b16 %v1531
      %v1550 = vunpack.c.l.b16 %v1532
      %v1551 = vunpack.c.l.b16 %v1533
      %v1552 = vunpack.c.l.b16 %v1534
      %v1553 = vpack.c.b16 %v1545, %v1544
      %v1554 = vpack.c.b16 %v1547, %v1546
      %v1555 = vpack.c.b16 %v1549, %v1548
      %v1556 = vpack.c.b16 %v1551, %v1550
      %v1557 = vpack.c.b16 %v1552, %v1552
      %vm1562 = vcmask 588800
      %v1564 = vsel %vm1562, %v1522, 0
      %v1567 = vsel %vm1562, %v1523, 0
      %v1570 = vsel %vm1562, %v1524, 0
      %v1573 = vsel %vm1562, %v1525, 0
      %vm1575 = vcmask 1043456
      %v1577 = vsel %vm1575, %v1557, 0
      %1579 = vmatpush.bf16.msra.mxu0 0
      %1580 = vmatpush.bf16.msra.mxu0 0
      %1581 = vmatpush.bf16.msra.mxu0 0
      %1582 = vmatpush.bf16.msra.mxu0 %v1577
      %1583 = vmatpush.bf16.msra.mxu0 %v1556
      %1584 = vmatpush.bf16.msra.mxu0 %v1555
      %1585 = vmatpush.bf16.msra.mxu0 %v1554
      %1586 = vmatpush.bf16.msra.mxu0 %v1553
      %1587 = vmatmul.bf16.gmra.mxu0 %v1564
      %v1588 = vpop.f32.mrf.mxu0
      %v1589 = vadd.f32 0.0, %v1588
      %v1590 = vpop.f32.mrf.mxu0
      %v1591 = vadd.f32 0.0, %v1590
      %1592 = vmatmul.bf16.gmra.mxu0 %v1567
      %v1593 = vpop.f32.mrf.mxu0
      %v1594 = vadd.f32 0.0, %v1593
      %v1595 = vpop.f32.mrf.mxu0
      %v1596 = vadd.f32 0.0, %v1595
      %1597 = vmatmul.bf16.gmra.mxu0 %v1570
      %v1598 = vpop.f32.mrf.mxu0
      %v1599 = vadd.f32 0.0, %v1598
      %v1600 = vpop.f32.mrf.mxu0
      %v1601 = vadd.f32 0.0, %v1600
      %1602 = vmatmul.bf16.gmra.mxu0 %v1573
      %v1603 = vpop.f32.mrf.mxu0
      %v1604 = vadd.f32 0.0, %v1603
      %v1605 = vpop.f32.mrf.mxu0
      %v1606 = vadd.f32 0.0, %v1605
      %1607 = vdwg.mxu0
      %v1609 = vsel %vm280, %v990, 0
      %v1612 = vsel %vm280, %v991, 0
      %v1615 = vsel %vm280, %v992, 0
      %v1618 = vsel %vm280, %v993, 0
      %v1621 = vsel %vm1027, %v994, 0
      %1623 = vmatpush.bf16.msra.mxu0 0
      %1624 = vmatpush.bf16.msra.mxu0 0
      %1625 = vmatpush.bf16.msra.mxu0 0
      %1626 = vmatpush.bf16.msra.mxu0 0
      %1627 = vmatpush.bf16.msra.mxu0 0
      %1628 = vmatpush.bf16.msra.mxu0 0
      %1629 = vmatpush.bf16.msra.mxu0 0
      %1630 = vmatpush.bf16.msra.mxu0 %v1621
      %1631 = vmatmul.bf16.gmra.mxu0 %v1609
      %v1632 = vpop.f32.mrf.mxu0
      %v1633 = vadd.f32 %v1589, %v1632
      %v1634 = vpop.f32.mrf.mxu0
      %v1635 = vadd.f32 %v1591, %v1634
      %1636 = vmatmul.bf16.gmra.mxu0 %v1612
      %v1637 = vpop.f32.mrf.mxu0
      %v1638 = vadd.f32 %v1594, %v1637
      %v1639 = vpop.f32.mrf.mxu0
      %v1640 = vadd.f32 %v1596, %v1639
      %1641 = vmatmul.bf16.gmra.mxu0 %v1615
      %v1642 = vpop.f32.mrf.mxu0
      %v1643 = vadd.f32 %v1599, %v1642
      %v1644 = vpop.f32.mrf.mxu0
      %v1645 = vadd.f32 %v1601, %v1644
      %1646 = vmatmul.bf16.gmra.mxu0 %v1618
      %v1647 = vpop.f32.mrf.mxu0
      %v1648 = vadd.f32 %v1604, %v1647
      %v1649 = vpop.f32.mrf.mxu0
      %v1650 = vadd.f32 %v1606, %v1649
      %1651 = vdwg.mxu0
      %1652 = vst.msk [vmem:[%s278] sm:$0xff] %vm1068, %v1633
      %1653 = vst.msk [vmem:[%s278 + $0x8] sm:$0xff] %vm1068, %v1635
      %1654 = vst.msk [vmem:[%s278 + $0x10] sm:$0xff] %vm1068, %v1638
      %1655 = vst.msk [vmem:[%s278 + $0x18] sm:$0xff] %vm1068, %v1640
      %1656 = vst.msk [vmem:[%s278 + $0x20] sm:$0xff] %vm1068, %v1643
      %1657 = vst.msk [vmem:[%s278 + $0x28] sm:$0xff] %vm1068, %v1645
      %1658 = vst.msk [vmem:[%s278 + $0x30] sm:$0xff] %vm1068, %v1648
      %1659 = vst.msk [vmem:[%s278 + $0x38] sm:$0xff] %vm1068, %v1650
      %p1660 = scmp.lt.s32.totalorder %s18, 1
      %s1661 = scalar_select %p1660, %s18, 1
      %s1662 = smul.addr %s1661, 8
      %s1663 = smul.addr %s1662, 8
      %s1664 = scalar_lea.vmem %s7, %s1663
      // Predicated region
      $region49: #{preact_block_wndrop_forward.1} parent=47 // pred_check
        %p1665 = pneg %p188
      $region50: #{preact_block_wndrop_forward.1} parent=47 // pred_check_branch
        %1667 = sbr.rel (%p1665) target = $region52
      $region51: #{preact_block_wndrop_forward.1} parent=47 // pred_region
        _
      $region52: #{preact_block_wndrop_forward.1} parent=47 // pred_fallthru
        _
    $region48: #{preact_block_wndrop_forward.1} parent=5 // pred_fallthru
      _
    %p1668 = scmp.le.s32.totalorder 2, %s13
    // Predicated region
    $region53: #{preact_block_wndrop_forward.1} parent=5 // pred_check
      %p1669 = pneg %p1668
    $region54: #{preact_block_wndrop_forward.1} parent=5 // pred_check_branch
      %1671 = sbr.rel (%p1669) target = $region56
    $region55: #{preact_block_wndrop_forward.1} parent=5 // pred_region
      %s1672 = ssub.s32 %s13, 2
      // Predicated region
      $region57: #{preact_block_wndrop_forward.1} parent=55 // pred_check
        %p1673 = pneg %p194
      $region58: #{preact_block_wndrop_forward.1} parent=55 // pred_check_branch
        %1675 = sbr.rel (%p1673) target = $region60
      $region59: #{preact_block_wndrop_forward.1} parent=55 // pred_region
        %p1676 = scmp.lt.s32.totalorder %s19, 1
        %s1677 = scalar_select %p1676, %s19, 1
        %s1678 = smul.addr %s1677, 8
        %s1679 = smul.addr %s1678, 8
        %s1680 = scalar_lea.vmem %s7, %s1679
      $region60: #{preact_block_wndrop_forward.1} parent=55 // pred_fallthru
        _
    $region56: #{preact_block_wndrop_forward.1} parent=5 // pred_fallthru
      _
  $region6: #{preact_block_wndrop_forward.1} parent=0 // loop_footer
    %s17 = sadd.s32 1, %s13
  $region7: #{preact_block_wndrop_forward.1} parent=0 // loop_footer_branch
    %12 = sbr.rel target = $region3
  $region8: #{preact_block_wndrop_forward.1} parent=0 // loop_exit
    _

</llo_original>
